<compile_context>
chip_gen: v6e
topology: v6e:2x2x1
jax: 0.10.0
libtpu: 0.0.40
codegen_flags: <defaults>
</compile_context>

<pallas_src>
import functools
import numpy as np
import jax
import jax.numpy as jnp
from jax import lax
from jax.experimental import pallas as pl
from jax.experimental.pallas import tpu as pltpu

EPS = 1e-5  # layernorm_eps default


def _layernorm(v, w, b=None, eps=EPS):
    mu = jnp.mean(v, axis=-1, keepdims=True)
    var = jnp.mean((v - mu) ** 2, axis=-1, keepdims=True)
    y = (v - mu) * lax.rsqrt(var + eps)
    y = y * w
    if b is not None:
        y = y + b
    return y


def esm3_layer_kernel(x_ref, cos_ref, sin_ref,
                      ln1_w_ref, ln1_b_ref, wqkv_ref,
                      qln_w_ref, kln_w_ref, wo_ref,
                      ln2_w_ref, ln2_b_ref, w13_ref, w2_ref,
                      out_ref,
                      q_slab, k_slab, v_slab, ctx_slab,
                      *, num_heads, head_dim, embed_dim, ffn_dim):
    H, D, E, F = num_heads, head_dim, embed_dim, ffn_dim
    bf16 = jnp.bfloat16

    x = x_ref[...]            # (S, E) fp32 — leading batch dim squeezed away

    # ---------------- attention block ----------------
    h = _layernorm(x, ln1_w_ref[...], ln1_b_ref[...])
    qkv = jnp.dot(h.astype(bf16), wqkv_ref[...],
                  preferred_element_type=jnp.float32)          # (S, 3E)
    # 128-aligned lane slices of the fused QKV projection.
    q = qkv[:, 0:E]
    k = qkv[:, E:2 * E]
    v = qkv[:, 2 * E:3 * E]

    # QKNormRearrange: LayerNorm over the FULL embed dim (bias=False), fp32.
    # The attention scale (1/head_dim, per module semantics — not 1/sqrt) is
    # pre-folded into qln_w in the wrapper.
    q = _layernorm(q, qln_w_ref[...])
    k = _layernorm(k, kln_w_ref[...])

    # Head split ("b s (h d) -> h s d"): layout-only static loop (no compute).
    # TODO(synk): replace with a single grouped pltpu.einshape('s(hd)->hsd')
    # relayout once grouped-equation support is confirmed on the target build.
    for hh in range(H):
        lo = hh * D
        q_slab[hh] = q[:, lo:lo + D]
        k_slab[hh] = k[:, lo:lo + D]
        v_slab[hh] = v[:, lo:lo + D].astype(bf16)

    # RoPE on the whole (H,S,D) slabs: one roll (XLU) + two VPU FMAs each.
    # rotate_half(t) == roll(t, D//2, last-axis) * sign; sign folded into sin.
    cos3 = cos_ref[...][None, :, :]      # (1, S, D)
    sin3 = sin_ref[...][None, :, :]      # (1, S, D), sign already applied
    qs = q_slab[...]
    ks = k_slab[...]
    q_r = (qs * cos3 + pltpu.roll(qs, D // 2, 2) * sin3).astype(bf16)
    k_r = (ks * cos3 + pltpu.roll(ks, D // 2, 2) * sin3).astype(bf16)

    # Batched-head attention (bf16 operands, fp32 accumulation on the MXU).
    s = jnp.einsum('hqd,hkd->hqk', q_r, k_r,
                   preferred_element_type=jnp.float32)         # (H, S, S)
    s = s - jnp.max(s, axis=-1, keepdims=True)
    p = jnp.exp(s)
    row_sum = jnp.sum(p, axis=-1, keepdims=True)               # (H, S, 1)
    ctx3 = jnp.einsum('hqk,hkd->hqd', p.astype(bf16), v_slab[...],
                      preferred_element_type=jnp.float32)      # (H, S, D)
    # Post-PV normalization: exact reciprocal on (H,S,D) instead of an
    # (H,S,S) multiply — cheaper and numerically tighter.
    ctx3 = ctx3 / row_sum

    # Head merge ("h s d -> s (h d)"): layout-only stores into a lane-dense
    # (S, E) slab feeding the wo matmul (keeps K=E for the contraction).
    # TODO(synk): with grouped einshape ('hsd->s(hd)') this loop and the
    # scratch slab disappear.
    for hh in range(H):
        ctx_slab[:, hh * D:(hh + 1) * D] = ctx3[hh].astype(bf16)

    # 1/layerwise_scale pre-folded into wo.
    x1 = x + jnp.dot(ctx_slab[...], wo_ref[...],
                     preferred_element_type=jnp.float32)

    # ---------------- SwiGLU FFN block ----------------
    h2 = _layernorm(x1, ln2_w_ref[...], ln2_b_ref[...]).astype(bf16)
    gu = jnp.dot(h2, w13_ref[...], preferred_element_type=jnp.float32)  # (S, 2F)
    g = gu[:, 0:F]
    u = gu[:, F:2 * F]
    hidden = (g * jax.nn.sigmoid(g)) * u                        # SiLU(gate) * up
    # 1/layerwise_scale pre-folded into w2.
    out_ref[...] = x1 + jnp.dot(hidden.astype(bf16), w2_ref[...],
                                preferred_element_type=jnp.float32)


def prepare_layer_params(params, cos, sin, *, head_dim, layerwise_scale):
    """One-time parameter prep (not per call): fuse QKV / gate-up weights,
    fold 1/head_dim into qln_w and 1/layerwise_scale into wo/w2, cast matmul
    weights to bf16, fold the rotate_half sign into sin."""
    bf16 = jnp.bfloat16
    inv_ls = np.float32(1.0 / layerwise_scale)
    D = head_dim
    prepped = {
        'ln1_w': params['ln1_w'],
        'ln1_b': params['ln1_b'],
        'wqkv': jnp.concatenate([params['wq'], params['wk'], params['wv']],
                                axis=1).astype(bf16),
        'qln_w': params['qln_w'] * np.float32(1.0 / head_dim),
        'kln_w': params['kln_w'],
        'wo': (params['wo'] * inv_ls).astype(bf16),
        'ln2_w': params['ln2_w'],
        'ln2_b': params['ln2_b'],
        'w13': jnp.concatenate([params['w1'], params['w3']], axis=1).astype(bf16),
        'w2': (params['w2'] * inv_ls).astype(bf16),
    }
    # rotate_half(t) == roll(t, D//2) * sign with sign = [-1]*D/2 ++ [+1]*D/2
    # (half-length roll of a D-long axis is direction-agnostic).
    sign = jnp.concatenate([-jnp.ones((D // 2,), jnp.float32),
                            jnp.ones((D // 2,), jnp.float32)])
    return prepped, cos, sin * sign


def _padded_bytes(shape, dtype):
    """VMEM footprint of a tile, padding last dim to 128 lanes and the
    second-last to 8 sublanes (conservative across dtypes)."""
    shape = tuple(int(d) for d in shape)
    itemsize = jnp.dtype(dtype).itemsize
    lane = -(-shape[-1] // 128) * 128
    sub = (-(-shape[-2] // 8) * 8) if len(shape) >= 2 else 1
    lead = int(np.prod(shape[:-2])) if len(shape) > 2 else 1
    return lead * sub * lane * itemsize


def esm3_transformer_layer(x, cos, sin_signed, prepped, *, num_heads, head_dim,
                           single_buffer_weights=True):
    B, S, E = x.shape
    H, D = num_heads, head_dim
    F = prepped['w13'].shape[1] // 2
    bf16 = jnp.bfloat16

    wnames = ('ln1_w', 'ln1_b', 'wqkv', 'qln_w', 'kln_w', 'wo',
              'ln2_w', 'ln2_b', 'w13', 'w2')
    weight_list = [prepped[n] for n in wnames]

    def const_spec(arr):
        idx = lambda b, _nd=arr.ndim: (0,) * _nd
        if single_buffer_weights:
            # Constant blocks never change across the grid -> single-buffer
            # them (halves constant-weight VMEM; matters on v7x's 64 MiB).
            return pl.BlockSpec(arr.shape, idx, pipeline_mode=pl.Buffered(1))
        return pl.BlockSpec(arr.shape, idx)

    x_spec = pl.BlockSpec((pl.Squeezed(), S, E), lambda b: (b, 0, 0))
    out_spec = pl.BlockSpec((pl.Squeezed(), S, E), lambda b: (b, 0, 0))

    # ---- VMEM budget (lane/sublane padding accounted) ----
    wbytes = sum(_padded_bytes(w.shape, w.dtype) for w in weight_list)
    wbytes += _padded_bytes(cos.shape, cos.dtype)
    wbytes += _padded_bytes(sin_signed.shape, sin_signed.dtype)
    wbytes *= 1 if single_buffer_weights else 2
    io_bytes = 2 * 2 * _padded_bytes((S, E), jnp.float32)          # x/out, dbl-buffered
    slab_bytes = (2 * _padded_bytes((H, S, D), jnp.float32)        # q/k fp32 slabs
                  + _padded_bytes((H, S, D), bf16)                 # v bf16 slab
                  + _padded_bytes((S, E), bf16))                   # ctx slab
    interm_bytes = (6 * _padded_bytes((S, E), jnp.float32)
                    + _padded_bytes((S, 3 * E), jnp.float32)
                    + _padded_bytes((S, 2 * F), jnp.float32)
                    + _padded_bytes((S, F), jnp.float32)
                    + 2 * _padded_bytes((H, S, S), jnp.float32)    # scores + probs
                    + 3 * _padded_bytes((H, S, D), jnp.float32))   # roped q/k, ctx3
    est = wbytes + io_bytes + slab_bytes + interm_bytes

    # Generation-aware cap: ~3/4 of per-core VMEM (≈48 MiB on v7x's 64 MiB,
    # ≈96 MiB on v5e/v6e's 128 MiB) leaves headroom for compiler scratch.
    try:
        vmem_cap = int(pltpu.get_tpu_info().vmem_capacity_bytes)
    except Exception:  # hardware query only; conservative default (v7x-like)
        vmem_cap = 64 * 1024 * 1024
    cap = (3 * vmem_cap) // 4
    vmem_limit = int(min(max(2 * est, 32 * 1024 * 1024), cap))

    kernel = functools.partial(esm3_layer_kernel, num_heads=H, head_dim=D,
                               embed_dim=E, ffn_dim=F)

    # TODO(synk): for production S, add a flash-style KV-tile axis with online
    # softmax (bounds the fp32 (H,S,S) score slab) and a second "parallel"
    # grid axis (query tiles / head groups) for v7x two-TensorCore occupancy;
    # at these small demo shapes the full-S attention fits VMEM comfortably.
    return pl.pallas_call(
        kernel,
        out_shape=jax.ShapeDtypeStruct((B, S, E), jnp.float32),
        grid=(B,),
        in_specs=[x_spec, const_spec(cos), const_spec(sin_signed)]
                 + [const_spec(w) for w in weight_list],
        out_specs=out_spec,
        scratch_shapes=[pltpu.VMEM((H, S, D), jnp.float32),   # q slab (fp32 for rope)
                        pltpu.VMEM((H, S, D), jnp.float32),   # k slab
                        pltpu.VMEM((H, S, D), bf16),          # v slab
                        pltpu.VMEM((S, E), bf16)],            # ctx slab
        compiler_params=pltpu.CompilerParams(
            dimension_semantics=("parallel",),   # batch is data-parallel
            vmem_limit_bytes=vmem_limit),
    )(x, cos, sin_signed, *weight_list)


def reference(x, cos, sin, p, num_heads, head_dim, layerwise_scale):
    """Pure-JAX fp32 reference of the same forward pass."""
    def ln(v, w, b=None):
        mu = jnp.mean(v, -1, keepdims=True)
        var = jnp.mean((v - mu) ** 2, -1, keepdims=True)
        y = (v - mu) / jnp.sqrt(var + EPS) * w
        return y + b if b is not None else y

    B, S, E = x.shape
    res = x
    h = ln(x, p['ln1_w'], p['ln1_b'])
    q = h @ p['wq']; k = h @ p['wk']; v = h @ p['wv']
    q = ln(q, p['qln_w']); k = ln(k, p['kln_w'])
    q = q.reshape(B, S, num_heads, head_dim)
    k = k.reshape(B, S, num_heads, head_dim)
    v = v.reshape(B, S, num_heads, head_dim)

    def rot(t):
        half = head_dim // 2
        return jnp.concatenate([-t[..., half:], t[..., :half]], -1)

    c = cos[None, :, None, :]
    s = sin[None, :, None, :]
    q = q * c + rot(q) * s
    k = k * c + rot(k) * s
    scale = 1.0 / head_dim
    attn = jnp.einsum('bshd,bthd->bhst', q, k) * scale
    attn = jax.nn.softmax(attn, axis=-1)
    ctx = jnp.einsum('bhst,bthd->bshd', attn, v).reshape(B, S, E)
    x1 = res + (ctx @ p['wo']) / layerwise_scale
    res = x1
    h2 = ln(x1, p['ln2_w'], p['ln2_b'])
    g = h2 @ p['w1']; u = h2 @ p['w3']
    hid = jax.nn.silu(g) * u
    return res + (hid @ p['w2']) / layerwise_scale


if __name__ == "__main__":
    B, S = 2, 16
    E, H = 128, 4              # E multiple of 128 -> lane-dense blocks/stores
    D = E // H                 # head_dim = 32
    F = 256
    layerwise_scale = 2.0

    key = jax.random.PRNGKey(0)
    ks = jax.random.split(key, 16)

    def n(k, shape, scale=1.0):
        return jax.random.normal(k, shape, dtype=jnp.float32) * scale

    params = {
        'ln1_w': 1.0 + 0.1 * n(ks[0], (1, E)),
        'ln1_b': 0.1 * n(ks[1], (1, E)),
        'wq': n(ks[2], (E, E), 1.0 / np.sqrt(E)),
        'wk': n(ks[3], (E, E), 1.0 / np.sqrt(E)),
        'wv': n(ks[4], (E, E), 1.0 / np.sqrt(E)),
        'qln_w': 1.0 + 0.1 * n(ks[5], (1, E)),
        'kln_w': 1.0 + 0.1 * n(ks[6], (1, E)),
        'wo': n(ks[7], (E, E), 1.0 / np.sqrt(E)),
        'ln2_w': 1.0 + 0.1 * n(ks[8], (1, E)),
        'ln2_b': 0.1 * n(ks[9], (1, E)),
        'w1': n(ks[10], (E, F), 1.0 / np.sqrt(E)),
        'w3': n(ks[11], (E, F), 1.0 / np.sqrt(E)),
        'w2': n(ks[12], (F, E), 1.0 / np.sqrt(F)),
    }

    # rotary cos/sin caches (standard rotary_base=10000)
    inv_freq = 1.0 / (10000.0 ** (np.arange(0, D, 2, dtype=np.float32) / D))
    t = np.arange(S, dtype=np.float32)
    freqs = np.einsum('i,j->ij', t, inv_freq)
    emb = np.concatenate([freqs, freqs], axis=-1)          # (S, D)
    cos = jnp.asarray(np.cos(emb), dtype=jnp.float32)
    sin = jnp.asarray(np.sin(emb), dtype=jnp.float32)

    x = n(ks[13], (B, S, E))

    prepped, cos_p, sin_p = prepare_layer_params(
        params, cos, sin, head_dim=D, layerwise_scale=layerwise_scale)

    run = functools.partial(esm3_transformer_layer, x, cos_p, sin_p, prepped,
                            num_heads=H, head_dim=D)

    # Scoped fallback: only lowering/compile rejections of pl.Buffered(1)
    # single-buffering retry with default double-buffered constant weights;
    # anything else fails loudly (per perf review).
    fallback_errs = [pltpu.LoweringException, NotImplementedError,
                     ValueError, TypeError]
    if hasattr(jax, "errors") and hasattr(jax.errors, "JaxRuntimeError"):
        fallback_errs.append(jax.errors.JaxRuntimeError)
    try:
        out = jax.block_until_ready(run(single_buffer_weights=True))
    except tuple(fallback_errs):
        out = jax.block_until_ready(run(single_buffer_weights=False))

    ref = reference(x, cos, sin, params, H, D, layerwise_scale)
    # bf16 matmul operands vs fp32 reference -> 2e-2 tolerance.
    np.testing.assert_allclose(np.asarray(out), np.asarray(ref),
                               rtol=2e-2, atol=2e-2)

    # TODO(synk): key_padding_mask / tp_mesh tensor-parallel / special-heads
    # rotary branches of the PyTorch module are not exercised (None/defaults).
    print("KERNEL_OK")
</pallas_src>

<mosaic_0001>
module attributes {stable_mosaic.version = 11 : i64} {
  func.func @esm3_layer_kernel(%arg0: i32, %arg1: memref<1x16x128xf32, #tpu.memory_space<vmem>>, %arg2: memref<16x32xf32, #tpu.memory_space<vmem>>, %arg3: memref<16x32xf32, #tpu.memory_space<vmem>>, %arg4: memref<1x128xf32, #tpu.memory_space<vmem>>, %arg5: memref<1x128xf32, #tpu.memory_space<vmem>>, %arg6: memref<128x384xbf16, #tpu.memory_space<vmem>>, %arg7: memref<1x128xf32, #tpu.memory_space<vmem>>, %arg8: memref<1x128xf32, #tpu.memory_space<vmem>>, %arg9: memref<128x128xbf16, #tpu.memory_space<vmem>>, %arg10: memref<1x128xf32, #tpu.memory_space<vmem>>, %arg11: memref<1x128xf32, #tpu.memory_space<vmem>>, %arg12: memref<128x512xbf16, #tpu.memory_space<vmem>>, %arg13: memref<256x128xbf16, #tpu.memory_space<vmem>>, %arg14: memref<1x16x128xf32, #tpu.memory_space<vmem>>, %arg15: memref<4x16x32xf32, #tpu.memory_space<vmem>>, %arg16: memref<4x16x32xf32, #tpu.memory_space<vmem>>, %arg17: memref<4x16x32xbf16, #tpu.memory_space<vmem>>, %arg18: memref<16x128xbf16, #tpu.memory_space<vmem>>) attributes {dimension_semantics = [#tpu.dimension_semantics<parallel>], iteration_bounds = array<i64: 2>, scalar_prefetch = 0 : i64, scratch_operands = 4 : i64, tpu.core_type = #tpu.core_type<tc>, window_params = [{transform_indices = @transform_0, window_bounds = array<i64: 1, 16, 128>}, {pipeline_mode = #tpu.pipeline_mode<synchronous>, transform_indices = @transform_1, window_bounds = array<i64: 16, 32>}, {pipeline_mode = #tpu.pipeline_mode<synchronous>, transform_indices = @transform_2, window_bounds = array<i64: 16, 32>}, {pipeline_mode = #tpu.pipeline_mode<synchronous>, transform_indices = @transform_3, window_bounds = array<i64: 1, 128>}, {pipeline_mode = #tpu.pipeline_mode<synchronous>, transform_indices = @transform_4, window_bounds = array<i64: 1, 128>}, {pipeline_mode = #tpu.pipeline_mode<synchronous>, transform_indices = @transform_5, window_bounds = array<i64: 128, 384>}, {pipeline_mode = #tpu.pipeline_mode<synchronous>, transform_indices = @transform_6, window_bounds = array<i64: 1, 128>}, {pipeline_mode = #tpu.pipeline_mode<synchronous>, transform_indices = @transform_7, window_bounds = array<i64: 1, 128>}, {pipeline_mode = #tpu.pipeline_mode<synchronous>, transform_indices = @transform_8, window_bounds = array<i64: 128, 128>}, {pipeline_mode = #tpu.pipeline_mode<synchronous>, transform_indices = @transform_9, window_bounds = array<i64: 1, 128>}, {pipeline_mode = #tpu.pipeline_mode<synchronous>, transform_indices = @transform_10, window_bounds = array<i64: 1, 128>}, {pipeline_mode = #tpu.pipeline_mode<synchronous>, transform_indices = @transform_11, window_bounds = array<i64: 128, 512>}, {pipeline_mode = #tpu.pipeline_mode<synchronous>, transform_indices = @transform_12, window_bounds = array<i64: 256, 128>}, {transform_indices = @transform_13, window_bounds = array<i64: 1, 16, 128>}]} {
    %c0 = arith.constant 0 : index
    %c0_0 = arith.constant 0 : index
    %c0_1 = arith.constant 0 : index
    %0 = vector.load %arg1[%c0, %c0_0, %c0_1] : memref<1x16x128xf32, #tpu.memory_space<vmem>>, vector<1x16x128xf32>
    %1 = vector.shape_cast %0 : vector<1x16x128xf32> to vector<16x128xf32>
    %c0_2 = arith.constant 0 : index
    %c0_3 = arith.constant 0 : index
    %2 = vector.load %arg4[%c0_2, %c0_3] : memref<1x128xf32, #tpu.memory_space<vmem>>, vector<1x128xf32>
    %c0_4 = arith.constant 0 : index
    %c0_5 = arith.constant 0 : index
    %3 = vector.load %arg5[%c0_4, %c0_5] : memref<1x128xf32, #tpu.memory_space<vmem>>, vector<1x128xf32>
    %cst = arith.constant dense<0.000000e+00> : vector<16xf32>
    %4 = vector.multi_reduction <add>, %1, %cst [1] : vector<16x128xf32> to vector<16xf32>
    %5 = vector.shape_cast %4 : vector<16xf32> to vector<16x1xf32>
    %cst_6 = arith.constant 1.280000e+02 : f32
    %6 = vector.broadcast %cst_6 : f32 to vector<16x1xf32>
    %7 = arith.divf %5, %6 : vector<16x1xf32>
    %8 = vector.broadcast %7 : vector<16x1xf32> to vector<16x128xf32>
    %9 = arith.subf %1, %8 : vector<16x128xf32>
    %10 = arith.mulf %9, %9 : vector<16x128xf32>
    %cst_7 = arith.constant dense<0.000000e+00> : vector<16xf32>
    %11 = vector.multi_reduction <add>, %10, %cst_7 [1] : vector<16x128xf32> to vector<16xf32>
    %12 = vector.shape_cast %11 : vector<16xf32> to vector<16x1xf32>
    %cst_8 = arith.constant 1.280000e+02 : f32
    %13 = vector.broadcast %cst_8 : f32 to vector<16x1xf32>
    %14 = arith.divf %12, %13 : vector<16x1xf32>
    %15 = vector.broadcast %7 : vector<16x1xf32> to vector<16x128xf32>
    %16 = arith.subf %1, %15 : vector<16x128xf32>
    %cst_9 = arith.constant 9.99999974E-6 : f32
    %17 = vector.broadcast %cst_9 : f32 to vector<16x1xf32>
    %18 = arith.addf %14, %17 : vector<16x1xf32>
    %19 = math.rsqrt %18 : vector<16x1xf32>
    %20 = vector.broadcast %19 : vector<16x1xf32> to vector<16x128xf32>
    %21 = arith.mulf %16, %20 : vector<16x128xf32>
    %22 = vector.broadcast %2 : vector<1x128xf32> to vector<16x128xf32>
    %23 = arith.mulf %21, %22 : vector<16x128xf32>
    %24 = vector.broadcast %3 : vector<1x128xf32> to vector<16x128xf32>
    %25 = arith.addf %23, %24 : vector<16x128xf32>
    %26 = arith.truncf %25 : vector<16x128xf32> to vector<16x128xbf16>
    %c0_10 = arith.constant 0 : index
    %c0_11 = arith.constant 0 : index
    %27 = vector.load %arg6[%c0_10, %c0_11] : memref<128x384xbf16, #tpu.memory_space<vmem>>, vector<128x384xbf16>
    %cst_12 = arith.constant dense<0.000000e+00> : vector<16x384xf32>
    %28 = tpu.matmul %26, %27, %cst_12 {dimension_numbers = #tpu.dot_dimension_numbers<[1], [0], [0], [1], [0, 0, 1, 1], [], []>} : vector<16x128xbf16>, vector<128x384xbf16>, vector<16x384xf32> -> vector<16x384xf32>
    %29 = vector.extract_strided_slice %28 {offsets = [0, 0], sizes = [16, 128], strides = [1, 1]} : vector<16x384xf32> to vector<16x128xf32>
    %30 = vector.extract_strided_slice %28 {offsets = [0, 128], sizes = [16, 128], strides = [1, 1]} : vector<16x384xf32> to vector<16x128xf32>
    %31 = vector.extract_strided_slice %28 {offsets = [0, 256], sizes = [16, 128], strides = [1, 1]} : vector<16x384xf32> to vector<16x128xf32>
    %c0_13 = arith.constant 0 : index
    %c0_14 = arith.constant 0 : index
    %32 = vector.load %arg7[%c0_13, %c0_14] : memref<1x128xf32, #tpu.memory_space<vmem>>, vector<1x128xf32>
    %cst_15 = arith.constant dense<0.000000e+00> : vector<16xf32>
    %33 = vector.multi_reduction <add>, %29, %cst_15 [1] : vector<16x128xf32> to vector<16xf32>
    %34 = vector.shape_cast %33 : vector<16xf32> to vector<16x1xf32>
    %cst_16 = arith.constant 1.280000e+02 : f32
    %35 = vector.broadcast %cst_16 : f32 to vector<16x1xf32>
    %36 = arith.divf %34, %35 : vector<16x1xf32>
    %37 = vector.broadcast %36 : vector<16x1xf32> to vector<16x128xf32>
    %38 = arith.subf %29, %37 : vector<16x128xf32>
    %39 = arith.mulf %38, %38 : vector<16x128xf32>
    %cst_17 = arith.constant dense<0.000000e+00> : vector<16xf32>
    %40 = vector.multi_reduction <add>, %39, %cst_17 [1] : vector<16x128xf32> to vector<16xf32>
    %41 = vector.shape_cast %40 : vector<16xf32> to vector<16x1xf32>
    %cst_18 = arith.constant 1.280000e+02 : f32
    %42 = vector.broadcast %cst_18 : f32 to vector<16x1xf32>
    %43 = arith.divf %41, %42 : vector<16x1xf32>
    %44 = vector.broadcast %36 : vector<16x1xf32> to vector<16x128xf32>
    %45 = arith.subf %29, %44 : vector<16x128xf32>
    %cst_19 = arith.constant 9.99999974E-6 : f32
    %46 = vector.broadcast %cst_19 : f32 to vector<16x1xf32>
    %47 = arith.addf %43, %46 : vector<16x1xf32>
    %48 = math.rsqrt %47 : vector<16x1xf32>
    %49 = vector.broadcast %48 : vector<16x1xf32> to vector<16x128xf32>
    %50 = arith.mulf %45, %49 : vector<16x128xf32>
    %51 = vector.broadcast %32 : vector<1x128xf32> to vector<16x128xf32>
    %52 = arith.mulf %50, %51 : vector<16x128xf32>
    %c0_20 = arith.constant 0 : index
    %c0_21 = arith.constant 0 : index
    %53 = vector.load %arg8[%c0_20, %c0_21] : memref<1x128xf32, #tpu.memory_space<vmem>>, vector<1x128xf32>
    %cst_22 = arith.constant dense<0.000000e+00> : vector<16xf32>
    %54 = vector.multi_reduction <add>, %30, %cst_22 [1] : vector<16x128xf32> to vector<16xf32>
    %55 = vector.shape_cast %54 : vector<16xf32> to vector<16x1xf32>
    %cst_23 = arith.constant 1.280000e+02 : f32
    %56 = vector.broadcast %cst_23 : f32 to vector<16x1xf32>
    %57 = arith.divf %55, %56 : vector<16x1xf32>
    %58 = vector.broadcast %57 : vector<16x1xf32> to vector<16x128xf32>
    %59 = arith.subf %30, %58 : vector<16x128xf32>
    %60 = arith.mulf %59, %59 : vector<16x128xf32>
    %cst_24 = arith.constant dense<0.000000e+00> : vector<16xf32>
    %61 = vector.multi_reduction <add>, %60, %cst_24 [1] : vector<16x128xf32> to vector<16xf32>
    %62 = vector.shape_cast %61 : vector<16xf32> to vector<16x1xf32>
    %cst_25 = arith.constant 1.280000e+02 : f32
    %63 = vector.broadcast %cst_25 : f32 to vector<16x1xf32>
    %64 = arith.divf %62, %63 : vector<16x1xf32>
    %65 = vector.broadcast %57 : vector<16x1xf32> to vector<16x128xf32>
    %66 = arith.subf %30, %65 : vector<16x128xf32>
    %cst_26 = arith.constant 9.99999974E-6 : f32
    %67 = vector.broadcast %cst_26 : f32 to vector<16x1xf32>
    %68 = arith.addf %64, %67 : vector<16x1xf32>
    %69 = math.rsqrt %68 : vector<16x1xf32>
    %70 = vector.broadcast %69 : vector<16x1xf32> to vector<16x128xf32>
    %71 = arith.mulf %66, %70 : vector<16x128xf32>
    %72 = vector.broadcast %53 : vector<1x128xf32> to vector<16x128xf32>
    %73 = arith.mulf %71, %72 : vector<16x128xf32>
    %74 = vector.extract_strided_slice %52 {offsets = [0, 0], sizes = [16, 32], strides = [1, 1]} : vector<16x128xf32> to vector<16x32xf32>
    %c0_27 = arith.constant 0 : index
    %c0_28 = arith.constant 0 : index
    %c0_29 = arith.constant 0 : index
    %75 = vector.load %arg15[%c0_27, %c0_28, %c0_29] : memref<4x16x32xf32, #tpu.memory_space<vmem>>, vector<1x16x32xf32>
    %76 = vector.shape_cast %75 : vector<1x16x32xf32> to vector<16x32xf32>
    %77 = vector.shape_cast %74 : vector<16x32xf32> to vector<1x16x32xf32>
    tpu.vector_store %arg15[%c0_27, %c0_28, %c0_29], %77 {strides = array<i32>} : memref<4x16x32xf32, #tpu.memory_space<vmem>>, vector<1x16x32xf32>,
    %78 = vector.extract_strided_slice %73 {offsets = [0, 0], sizes = [16, 32], strides = [1, 1]} : vector<16x128xf32> to vector<16x32xf32>
    %c0_30 = arith.constant 0 : index
    %c0_31 = arith.constant 0 : index
    %c0_32 = arith.constant 0 : index
    %79 = vector.load %arg16[%c0_30, %c0_31, %c0_32] : memref<4x16x32xf32, #tpu.memory_space<vmem>>, vector<1x16x32xf32>
    %80 = vector.shape_cast %79 : vector<1x16x32xf32> to vector<16x32xf32>
    %81 = vector.shape_cast %78 : vector<16x32xf32> to vector<1x16x32xf32>
    tpu.vector_store %arg16[%c0_30, %c0_31, %c0_32], %81 {strides = array<i32>} : memref<4x16x32xf32, #tpu.memory_space<vmem>>, vector<1x16x32xf32>,
    %82 = vector.extract_strided_slice %31 {offsets = [0, 0], sizes = [16, 32], strides = [1, 1]} : vector<16x128xf32> to vector<16x32xf32>
    %83 = arith.truncf %82 : vector<16x32xf32> to vector<16x32xbf16>
    %c0_33 = arith.constant 0 : index
    %c0_34 = arith.constant 0 : index
    %c0_35 = arith.constant 0 : index
    %84 = vector.load %arg17[%c0_33, %c0_34, %c0_35] : memref<4x16x32xbf16, #tpu.memory_space<vmem>>, vector<1x16x32xbf16>
    %85 = vector.shape_cast %84 : vector<1x16x32xbf16> to vector<16x32xbf16>
    %86 = vector.shape_cast %83 : vector<16x32xbf16> to vector<1x16x32xbf16>
    tpu.vector_store %arg17[%c0_33, %c0_34, %c0_35], %86 {strides = array<i32>} : memref<4x16x32xbf16, #tpu.memory_space<vmem>>, vector<1x16x32xbf16>,
    %87 = vector.extract_strided_slice %52 {offsets = [0, 32], sizes = [16, 32], strides = [1, 1]} : vector<16x128xf32> to vector<16x32xf32>
    %c1 = arith.constant 1 : index
    %c0_36 = arith.constant 0 : index
    %c0_37 = arith.constant 0 : index
    %88 = vector.load %arg15[%c1, %c0_36, %c0_37] : memref<4x16x32xf32, #tpu.memory_space<vmem>>, vector<1x16x32xf32>
    %89 = vector.shape_cast %88 : vector<1x16x32xf32> to vector<16x32xf32>
    %90 = vector.shape_cast %87 : vector<16x32xf32> to vector<1x16x32xf32>
    tpu.vector_store %arg15[%c1, %c0_36, %c0_37], %90 {strides = array<i32>} : memref<4x16x32xf32, #tpu.memory_space<vmem>>, vector<1x16x32xf32>,
    %91 = vector.extract_strided_slice %73 {offsets = [0, 32], sizes = [16, 32], strides = [1, 1]} : vector<16x128xf32> to vector<16x32xf32>
    %c1_38 = arith.constant 1 : index
    %c0_39 = arith.constant 0 : index
    %c0_40 = arith.constant 0 : index
    %92 = vector.load %arg16[%c1_38, %c0_39, %c0_40] : memref<4x16x32xf32, #tpu.memory_space<vmem>>, vector<1x16x32xf32>
    %93 = vector.shape_cast %92 : vector<1x16x32xf32> to vector<16x32xf32>
    %94 = vector.shape_cast %91 : vector<16x32xf32> to vector<1x16x32xf32>
    tpu.vector_store %arg16[%c1_38, %c0_39, %c0_40], %94 {strides = array<i32>} : memref<4x16x32xf32, #tpu.memory_space<vmem>>, vector<1x16x32xf32>,
    %95 = vector.extract_strided_slice %31 {offsets = [0, 32], sizes = [16, 32], strides = [1, 1]} : vector<16x128xf32> to vector<16x32xf32>
    %96 = arith.truncf %95 : vector<16x32xf32> to vector<16x32xbf16>
    %c1_41 = arith.constant 1 : index
    %c0_42 = arith.constant 0 : index
    %c0_43 = arith.constant 0 : index
    %97 = vector.load %arg17[%c1_41, %c0_42, %c0_43] : memref<4x16x32xbf16, #tpu.memory_space<vmem>>, vector<1x16x32xbf16>
    %98 = vector.shape_cast %97 : vector<1x16x32xbf16> to vector<16x32xbf16>
    %99 = vector.shape_cast %96 : vector<16x32xbf16> to vector<1x16x32xbf16>
    tpu.vector_store %arg17[%c1_41, %c0_42, %c0_43], %99 {strides = array<i32>} : memref<4x16x32xbf16, #tpu.memory_space<vmem>>, vector<1x16x32xbf16>,
    %100 = vector.extract_strided_slice %52 {offsets = [0, 64], sizes = [16, 32], strides = [1, 1]} : vector<16x128xf32> to vector<16x32xf32>
    %c2 = arith.constant 2 : index
    %c0_44 = arith.constant 0 : index
    %c0_45 = arith.constant 0 : index
    %101 = vector.load %arg15[%c2, %c0_44, %c0_45] : memref<4x16x32xf32, #tpu.memory_space<vmem>>, vector<1x16x32xf32>
    %102 = vector.shape_cast %101 : vector<1x16x32xf32> to vector<16x32xf32>
    %103 = vector.shape_cast %100 : vector<16x32xf32> to vector<1x16x32xf32>
    tpu.vector_store %arg15[%c2, %c0_44, %c0_45], %103 {strides = array<i32>} : memref<4x16x32xf32, #tpu.memory_space<vmem>>, vector<1x16x32xf32>,
    %104 = vector.extract_strided_slice %73 {offsets = [0, 64], sizes = [16, 32], strides = [1, 1]} : vector<16x128xf32> to vector<16x32xf32>
    %c2_46 = arith.constant 2 : index
    %c0_47 = arith.constant 0 : index
    %c0_48 = arith.constant 0 : index
    %105 = vector.load %arg16[%c2_46, %c0_47, %c0_48] : memref<4x16x32xf32, #tpu.memory_space<vmem>>, vector<1x16x32xf32>
    %106 = vector.shape_cast %105 : vector<1x16x32xf32> to vector<16x32xf32>
    %107 = vector.shape_cast %104 : vector<16x32xf32> to vector<1x16x32xf32>
    tpu.vector_store %arg16[%c2_46, %c0_47, %c0_48], %107 {strides = array<i32>} : memref<4x16x32xf32, #tpu.memory_space<vmem>>, vector<1x16x32xf32>,
    %108 = vector.extract_strided_slice %31 {offsets = [0, 64], sizes = [16, 32], strides = [1, 1]} : vector<16x128xf32> to vector<16x32xf32>
    %109 = arith.truncf %108 : vector<16x32xf32> to vector<16x32xbf16>
    %c2_49 = arith.constant 2 : index
    %c0_50 = arith.constant 0 : index
    %c0_51 = arith.constant 0 : index
    %110 = vector.load %arg17[%c2_49, %c0_50, %c0_51] : memref<4x16x32xbf16, #tpu.memory_space<vmem>>, vector<1x16x32xbf16>
    %111 = vector.shape_cast %110 : vector<1x16x32xbf16> to vector<16x32xbf16>
    %112 = vector.shape_cast %109 : vector<16x32xbf16> to vector<1x16x32xbf16>
    tpu.vector_store %arg17[%c2_49, %c0_50, %c0_51], %112 {strides = array<i32>} : memref<4x16x32xbf16, #tpu.memory_space<vmem>>, vector<1x16x32xbf16>,
    %113 = vector.extract_strided_slice %52 {offsets = [0, 96], sizes = [16, 32], strides = [1, 1]} : vector<16x128xf32> to vector<16x32xf32>
    %c3 = arith.constant 3 : index
    %c0_52 = arith.constant 0 : index
    %c0_53 = arith.constant 0 : index
    %114 = vector.load %arg15[%c3, %c0_52, %c0_53] : memref<4x16x32xf32, #tpu.memory_space<vmem>>, vector<1x16x32xf32>
    %115 = vector.shape_cast %114 : vector<1x16x32xf32> to vector<16x32xf32>
    %116 = vector.shape_cast %113 : vector<16x32xf32> to vector<1x16x32xf32>
    tpu.vector_store %arg15[%c3, %c0_52, %c0_53], %116 {strides = array<i32>} : memref<4x16x32xf32, #tpu.memory_space<vmem>>, vector<1x16x32xf32>,
    %117 = vector.extract_strided_slice %73 {offsets = [0, 96], sizes = [16, 32], strides = [1, 1]} : vector<16x128xf32> to vector<16x32xf32>
    %c3_54 = arith.constant 3 : index
    %c0_55 = arith.constant 0 : index
    %c0_56 = arith.constant 0 : index
    %118 = vector.load %arg16[%c3_54, %c0_55, %c0_56] : memref<4x16x32xf32, #tpu.memory_space<vmem>>, vector<1x16x32xf32>
    %119 = vector.shape_cast %118 : vector<1x16x32xf32> to vector<16x32xf32>
    %120 = vector.shape_cast %117 : vector<16x32xf32> to vector<1x16x32xf32>
    tpu.vector_store %arg16[%c3_54, %c0_55, %c0_56], %120 {strides = array<i32>} : memref<4x16x32xf32, #tpu.memory_space<vmem>>, vector<1x16x32xf32>,
    %121 = vector.extract_strided_slice %31 {offsets = [0, 96], sizes = [16, 32], strides = [1, 1]} : vector<16x128xf32> to vector<16x32xf32>
    %122 = arith.truncf %121 : vector<16x32xf32> to vector<16x32xbf16>
    %c3_57 = arith.constant 3 : index
    %c0_58 = arith.constant 0 : index
    %c0_59 = arith.constant 0 : index
    %123 = vector.load %arg17[%c3_57, %c0_58, %c0_59] : memref<4x16x32xbf16, #tpu.memory_space<vmem>>, vector<1x16x32xbf16>
    %124 = vector.shape_cast %123 : vector<1x16x32xbf16> to vector<16x32xbf16>
    %125 = vector.shape_cast %122 : vector<16x32xbf16> to vector<1x16x32xbf16>
    tpu.vector_store %arg17[%c3_57, %c0_58, %c0_59], %125 {strides = array<i32>} : memref<4x16x32xbf16, #tpu.memory_space<vmem>>, vector<1x16x32xbf16>,
    %c0_60 = arith.constant 0 : index
    %c0_61 = arith.constant 0 : index
    %126 = vector.load %arg2[%c0_60, %c0_61] : memref<16x32xf32, #tpu.memory_space<vmem>>, vector<16x32xf32>
    %127 = vector.shape_cast %126 : vector<16x32xf32> to vector<1x16x32xf32>
    %c0_62 = arith.constant 0 : index
    %c0_63 = arith.constant 0 : index
    %128 = vector.load %arg3[%c0_62, %c0_63] : memref<16x32xf32, #tpu.memory_space<vmem>>, vector<16x32xf32>
    %129 = vector.shape_cast %128 : vector<16x32xf32> to vector<1x16x32xf32>
    %c0_64 = arith.constant 0 : index
    %c0_65 = arith.constant 0 : index
    %c0_66 = arith.constant 0 : index
    %130 = vector.load %arg15[%c0_64, %c0_65, %c0_66] : memref<4x16x32xf32, #tpu.memory_space<vmem>>, vector<4x16x32xf32>
    %c0_67 = arith.constant 0 : index
    %c0_68 = arith.constant 0 : index
    %c0_69 = arith.constant 0 : index
    %131 = vector.load %arg16[%c0_67, %c0_68, %c0_69] : memref<4x16x32xf32, #tpu.memory_space<vmem>>, vector<4x16x32xf32>
    %132 = vector.broadcast %127 : vector<1x16x32xf32> to vector<4x16x32xf32>
    %133 = arith.mulf %130, %132 : vector<4x16x32xf32>
    %c16_i32 = arith.constant 16 : i32
    %134 = tpu.dynamic_rotate %130 by %c16_i32 dim 2 : vector<4x16x32xf32>, i32 -> vector<4x16x32xf32>
    %135 = vector.broadcast %129 : vector<1x16x32xf32> to vector<4x16x32xf32>
    %136 = arith.mulf %134, %135 : vector<4x16x32xf32>
    %137 = arith.addf %133, %136 : vector<4x16x32xf32>
    %138 = arith.truncf %137 : vector<4x16x32xf32> to vector<4x16x32xbf16>
    %139 = vector.broadcast %127 : vector<1x16x32xf32> to vector<4x16x32xf32>
    %140 = arith.mulf %131, %139 : vector<4x16x32xf32>
    %c16_i32_70 = arith.constant 16 : i32
    %141 = tpu.dynamic_rotate %131 by %c16_i32_70 dim 2 : vector<4x16x32xf32>, i32 -> vector<4x16x32xf32>
    %142 = vector.broadcast %129 : vector<1x16x32xf32> to vector<4x16x32xf32>
    %143 = arith.mulf %141, %142 : vector<4x16x32xf32>
    %144 = arith.addf %140, %143 : vector<4x16x32xf32>
    %145 = arith.truncf %144 : vector<4x16x32xf32> to vector<4x16x32xbf16>
    "tpu.trace_start"() <{level = 10 : i32, message = "hqd,hkd->hqk"}> : () -> ()
    %cst_71 = arith.constant dense<0.000000e+00> : vector<4x16x16xf32>
    %146 = tpu.matmul %138, %145, %cst_71 {dimension_numbers = #tpu.dot_dimension_numbers<[2], [2], [1], [1], [0, 0, 0, 1, 1, 1], [0], [0]>} : vector<4x16x32xbf16>, vector<4x16x32xbf16>, vector<4x16x16xf32> -> vector<4x16x16xf32>
    "tpu.trace_stop"() : () -> ()
    %cst_72 = arith.constant dense<0xFF800000> : vector<4x16xf32>
    %147 = vector.multi_reduction <maximumf>, %146, %cst_72 [2] : vector<4x16x16xf32> to vector<4x16xf32>
    %148 = vector.shape_cast %147 : vector<4x16xf32> to vector<4x16x1xf32>
    %149 = vector.broadcast %148 : vector<4x16x1xf32> to vector<4x16x16xf32>
    %150 = arith.subf %146, %149 : vector<4x16x16xf32>
    %151 = math.exp %150 : vector<4x16x16xf32>
    %cst_73 = arith.constant dense<0.000000e+00> : vector<4x16xf32>
    %152 = vector.multi_reduction <add>, %151, %cst_73 [2] : vector<4x16x16xf32> to vector<4x16xf32>
    %153 = vector.shape_cast %152 : vector<4x16xf32> to vector<4x16x1xf32>
    %154 = arith.truncf %151 : vector<4x16x16xf32> to vector<4x16x16xbf16>
    %c0_74 = arith.constant 0 : index
    %c0_75 = arith.constant 0 : index
    %c0_76 = arith.constant 0 : index
    %155 = vector.load %arg17[%c0_74, %c0_75, %c0_76] : memref<4x16x32xbf16, #tpu.memory_space<vmem>>, vector<4x16x32xbf16>
    "tpu.trace_start"() <{level = 10 : i32, message = "hqk,hkd->hqd"}> : () -> ()
    %cst_77 = arith.constant dense<0.000000e+00> : vector<4x16x32xf32>
    %156 = tpu.matmul %154, %155, %cst_77 {dimension_numbers = #tpu.dot_dimension_numbers<[2], [1], [1], [2], [0, 0, 0, 1, 1, 2], [0], [0]>} : vector<4x16x16xbf16>, vector<4x16x32xbf16>, vector<4x16x32xf32> -> vector<4x16x32xf32>
    "tpu.trace_stop"() : () -> ()
    %157 = vector.broadcast %153 : vector<4x16x1xf32> to vector<4x16x32xf32>
    %158 = arith.divf %156, %157 : vector<4x16x32xf32>
    %159 = vector.extract_strided_slice %158 {offsets = [0, 0, 0], sizes = [1, 16, 32], strides = [1, 1, 1]} : vector<4x16x32xf32> to vector<1x16x32xf32>
    %160 = vector.shape_cast %159 : vector<1x16x32xf32> to vector<16x32xf32>
    %161 = arith.truncf %160 : vector<16x32xf32> to vector<16x32xbf16>
    %c0_78 = arith.constant 0 : index
    %c0_79 = arith.constant 0 : index
    %162 = vector.load %arg18[%c0_78, %c0_79] : memref<16x128xbf16, #tpu.memory_space<vmem>>, vector<16x32xbf16>
    tpu.vector_store %arg18[%c0_78, %c0_79], %161 {strides = array<i32>} : memref<16x128xbf16, #tpu.memory_space<vmem>>, vector<16x32xbf16>,
    %163 = vector.extract_strided_slice %158 {offsets = [1, 0, 0], sizes = [1, 16, 32], strides = [1, 1, 1]} : vector<4x16x32xf32> to vector<1x16x32xf32>
    %164 = vector.shape_cast %163 : vector<1x16x32xf32> to vector<16x32xf32>
    %165 = arith.truncf %164 : vector<16x32xf32> to vector<16x32xbf16>
    %c0_80 = arith.constant 0 : index
    %c32 = arith.constant 32 : index
    %166 = vector.load %arg18[%c0_80, %c32] : memref<16x128xbf16, #tpu.memory_space<vmem>>, vector<16x32xbf16>
    tpu.vector_store %arg18[%c0_80, %c32], %165 {strides = array<i32>} : memref<16x128xbf16, #tpu.memory_space<vmem>>, vector<16x32xbf16>,
    %167 = vector.extract_strided_slice %158 {offsets = [2, 0, 0], sizes = [1, 16, 32], strides = [1, 1, 1]} : vector<4x16x32xf32> to vector<1x16x32xf32>
    %168 = vector.shape_cast %167 : vector<1x16x32xf32> to vector<16x32xf32>
    %169 = arith.truncf %168 : vector<16x32xf32> to vector<16x32xbf16>
    %c0_81 = arith.constant 0 : index
    %c64 = arith.constant 64 : index
    %170 = vector.load %arg18[%c0_81, %c64] : memref<16x128xbf16, #tpu.memory_space<vmem>>, vector<16x32xbf16>
    tpu.vector_store %arg18[%c0_81, %c64], %169 {strides = array<i32>} : memref<16x128xbf16, #tpu.memory_space<vmem>>, vector<16x32xbf16>,
    %171 = vector.extract_strided_slice %158 {offsets = [3, 0, 0], sizes = [1, 16, 32], strides = [1, 1, 1]} : vector<4x16x32xf32> to vector<1x16x32xf32>
    %172 = vector.shape_cast %171 : vector<1x16x32xf32> to vector<16x32xf32>
    %173 = arith.truncf %172 : vector<16x32xf32> to vector<16x32xbf16>
    %c0_82 = arith.constant 0 : index
    %c96 = arith.constant 96 : index
    %174 = vector.load %arg18[%c0_82, %c96] : memref<16x128xbf16, #tpu.memory_space<vmem>>, vector<16x32xbf16>
    tpu.vector_store %arg18[%c0_82, %c96], %173 {strides = array<i32>} : memref<16x128xbf16, #tpu.memory_space<vmem>>, vector<16x32xbf16>,
    %c0_83 = arith.constant 0 : index
    %c0_84 = arith.constant 0 : index
    %175 = vector.load %arg18[%c0_83, %c0_84] : memref<16x128xbf16, #tpu.memory_space<vmem>>, vector<16x128xbf16>
    %c0_85 = arith.constant 0 : index
    %c0_86 = arith.constant 0 : index
    %176 = vector.load %arg9[%c0_85, %c0_86] : memref<128x128xbf16, #tpu.memory_space<vmem>>, vector<128x128xbf16>
    %cst_87 = arith.constant dense<0.000000e+00> : vector<16x128xf32>
    %177 = tpu.matmul %175, %176, %cst_87 {dimension_numbers = #tpu.dot_dimension_numbers<[1], [0], [0], [1], [0, 0, 1, 1], [], []>} : vector<16x128xbf16>, vector<128x128xbf16>, vector<16x128xf32> -> vector<16x128xf32>
    %178 = arith.addf %1, %177 : vector<16x128xf32>
    %c0_88 = arith.constant 0 : index
    %c0_89 = arith.constant 0 : index
    %179 = vector.load %arg10[%c0_88, %c0_89] : memref<1x128xf32, #tpu.memory_space<vmem>>, vector<1x128xf32>
    %c0_90 = arith.constant 0 : index
    %c0_91 = arith.constant 0 : index
    %180 = vector.load %arg11[%c0_90, %c0_91] : memref<1x128xf32, #tpu.memory_space<vmem>>, vector<1x128xf32>
    %cst_92 = arith.constant dense<0.000000e+00> : vector<16xf32>
    %181 = vector.multi_reduction <add>, %178, %cst_92 [1] : vector<16x128xf32> to vector<16xf32>
    %182 = vector.shape_cast %181 : vector<16xf32> to vector<16x1xf32>
    %cst_93 = arith.constant 1.280000e+02 : f32
    %183 = vector.broadcast %cst_93 : f32 to vector<16x1xf32>
    %184 = arith.divf %182, %183 : vector<16x1xf32>
    %185 = vector.broadcast %184 : vector<16x1xf32> to vector<16x128xf32>
    %186 = arith.subf %178, %185 : vector<16x128xf32>
    %187 = arith.mulf %186, %186 : vector<16x128xf32>
    %cst_94 = arith.constant dense<0.000000e+00> : vector<16xf32>
    %188 = vector.multi_reduction <add>, %187, %cst_94 [1] : vector<16x128xf32> to vector<16xf32>
    %189 = vector.shape_cast %188 : vector<16xf32> to vector<16x1xf32>
    %cst_95 = arith.constant 1.280000e+02 : f32
    %190 = vector.broadcast %cst_95 : f32 to vector<16x1xf32>
    %191 = arith.divf %189, %190 : vector<16x1xf32>
    %192 = vector.broadcast %184 : vector<16x1xf32> to vector<16x128xf32>
    %193 = arith.subf %178, %192 : vector<16x128xf32>
    %cst_96 = arith.constant 9.99999974E-6 : f32
    %194 = vector.broadcast %cst_96 : f32 to vector<16x1xf32>
    %195 = arith.addf %191, %194 : vector<16x1xf32>
    %196 = math.rsqrt %195 : vector<16x1xf32>
    %197 = vector.broadcast %196 : vector<16x1xf32> to vector<16x128xf32>
    %198 = arith.mulf %193, %197 : vector<16x128xf32>
    %199 = vector.broadcast %179 : vector<1x128xf32> to vector<16x128xf32>
    %200 = arith.mulf %198, %199 : vector<16x128xf32>
    %201 = vector.broadcast %180 : vector<1x128xf32> to vector<16x128xf32>
    %202 = arith.addf %200, %201 : vector<16x128xf32>
    %203 = arith.truncf %202 : vector<16x128xf32> to vector<16x128xbf16>
    %c0_97 = arith.constant 0 : index
    %c0_98 = arith.constant 0 : index
    %204 = vector.load %arg12[%c0_97, %c0_98] : memref<128x512xbf16, #tpu.memory_space<vmem>>, vector<128x512xbf16>
    %cst_99 = arith.constant dense<0.000000e+00> : vector<16x512xf32>
    %205 = tpu.matmul %203, %204, %cst_99 {dimension_numbers = #tpu.dot_dimension_numbers<[1], [0], [0], [1], [0, 0, 1, 1], [], []>} : vector<16x128xbf16>, vector<128x512xbf16>, vector<16x512xf32> -> vector<16x512xf32>
    %206 = vector.extract_strided_slice %205 {offsets = [0, 0], sizes = [16, 256], strides = [1, 1]} : vector<16x512xf32> to vector<16x256xf32>
    %207 = vector.extract_strided_slice %205 {offsets = [0, 256], sizes = [16, 256], strides = [1, 1]} : vector<16x512xf32> to vector<16x256xf32>
    %208 = arith.negf %206 : vector<16x256xf32>
    %209 = math.exp %208 : vector<16x256xf32>
    %cst_100 = arith.constant 1.000000e+00 : f32
    %210 = vector.broadcast %cst_100 : f32 to vector<16x256xf32>
    %211 = arith.addf %210, %209 : vector<16x256xf32>
    %212 = arith.divf %210, %211 : vector<16x256xf32>
    %213 = arith.mulf %206, %212 : vector<16x256xf32>
    %214 = arith.mulf %213, %207 : vector<16x256xf32>
    %215 = arith.truncf %214 : vector<16x256xf32> to vector<16x256xbf16>
    %c0_101 = arith.constant 0 : index
    %c0_102 = arith.constant 0 : index
    %216 = vector.load %arg13[%c0_101, %c0_102] : memref<256x128xbf16, #tpu.memory_space<vmem>>, vector<256x128xbf16>
    %cst_103 = arith.constant dense<0.000000e+00> : vector<16x128xf32>
    %217 = tpu.matmul %215, %216, %cst_103 {dimension_numbers = #tpu.dot_dimension_numbers<[1], [0], [0], [1], [0, 0, 1, 1], [], []>} : vector<16x256xbf16>, vector<256x128xbf16>, vector<16x128xf32> -> vector<16x128xf32>
    %218 = arith.addf %178, %217 : vector<16x128xf32>
    %c0_104 = arith.constant 0 : index
    %c0_105 = arith.constant 0 : index
    %c0_106 = arith.constant 0 : index
    %219 = vector.load %arg14[%c0_104, %c0_105, %c0_106] : memref<1x16x128xf32, #tpu.memory_space<vmem>>, vector<1x16x128xf32>
    %220 = vector.shape_cast %219 : vector<1x16x128xf32> to vector<16x128xf32>
    %221 = vector.shape_cast %218 : vector<16x128xf32> to vector<1x16x128xf32>
    tpu.vector_store %arg14[%c0_104, %c0_105, %c0_106], %221 {strides = array<i32>} : memref<1x16x128xf32, #tpu.memory_space<vmem>>, vector<1x16x128xf32>,
    return
  }
  func.func @transform_0(%arg0: i32) -> (i32, i32, i32) {
    %c0_i32 = arith.constant 0 : i32
    %c0_i32_0 = arith.constant 0 : i32
    %c0_i32_1 = arith.constant 0 : i32
    return %arg0, %c0_i32, %c0_i32_0 : i32, i32, i32
  }
  func.func @transform_1(%arg0: i32) -> (i32, i32) {
    %c0_i32 = arith.constant 0 : i32
    %c0_i32_0 = arith.constant 0 : i32
    %c0_i32_1 = arith.constant 0 : i32
    return %c0_i32, %c0_i32_0 : i32, i32
  }
  func.func @transform_2(%arg0: i32) -> (i32, i32) {
    %c0_i32 = arith.constant 0 : i32
    %c0_i32_0 = arith.constant 0 : i32
    %c0_i32_1 = arith.constant 0 : i32
    return %c0_i32, %c0_i32_0 : i32, i32
  }
  func.func @transform_3(%arg0: i32) -> (i32, i32) {
    %c0_i32 = arith.constant 0 : i32
    %c0_i32_0 = arith.constant 0 : i32
    %c0_i32_1 = arith.constant 0 : i32
    return %c0_i32, %c0_i32_0 : i32, i32
  }
  func.func @transform_4(%arg0: i32) -> (i32, i32) {
    %c0_i32 = arith.constant 0 : i32
    %c0_i32_0 = arith.constant 0 : i32
    %c0_i32_1 = arith.constant 0 : i32
    return %c0_i32, %c0_i32_0 : i32, i32
  }
  func.func @transform_5(%arg0: i32) -> (i32, i32) {
    %c0_i32 = arith.constant 0 : i32
    %c0_i32_0 = arith.constant 0 : i32
    %c0_i32_1 = arith.constant 0 : i32
    return %c0_i32, %c0_i32_0 : i32, i32
  }
  func.func @transform_6(%arg0: i32) -> (i32, i32) {
    %c0_i32 = arith.constant 0 : i32
    %c0_i32_0 = arith.constant 0 : i32
    %c0_i32_1 = arith.constant 0 : i32
    return %c0_i32, %c0_i32_0 : i32, i32
  }
  func.func @transform_7(%arg0: i32) -> (i32, i32) {
    %c0_i32 = arith.constant 0 : i32
    %c0_i32_0 = arith.constant 0 : i32
    %c0_i32_1 = arith.constant 0 : i32
    return %c0_i32, %c0_i32_0 : i32, i32
  }
  func.func @transform_8(%arg0: i32) -> (i32, i32) {
    %c0_i32 = arith.constant 0 : i32
    %c0_i32_0 = arith.constant 0 : i32
    %c0_i32_1 = arith.constant 0 : i32
    return %c0_i32, %c0_i32_0 : i32, i32
  }
  func.func @transform_9(%arg0: i32) -> (i32, i32) {
    %c0_i32 = arith.constant 0 : i32
    %c0_i32_0 = arith.constant 0 : i32
    %c0_i32_1 = arith.constant 0 : i32
    return %c0_i32, %c0_i32_0 : i32, i32
  }
  func.func @transform_10(%arg0: i32) -> (i32, i32) {
    %c0_i32 = arith.constant 0 : i32
    %c0_i32_0 = arith.constant 0 : i32
    %c0_i32_1 = arith.constant 0 : i32
    return %c0_i32, %c0_i32_0 : i32, i32
  }
  func.func @transform_11(%arg0: i32) -> (i32, i32) {
    %c0_i32 = arith.constant 0 : i32
    %c0_i32_0 = arith.constant 0 : i32
    %c0_i32_1 = arith.constant 0 : i32
    return %c0_i32, %c0_i32_0 : i32, i32
  }
  func.func @transform_12(%arg0: i32) -> (i32, i32) {
    %c0_i32 = arith.constant 0 : i32
    %c0_i32_0 = arith.constant 0 : i32
    %c0_i32_1 = arith.constant 0 : i32
    return %c0_i32, %c0_i32_0 : i32, i32
  }
  func.func @transform_13(%arg0: i32) -> (i32, i32, i32) {
    %c0_i32 = arith.constant 0 : i32
    %c0_i32_0 = arith.constant 0 : i32
    %c0_i32_1 = arith.constant 0 : i32
    return %arg0, %c0_i32, %c0_i32_0 : i32, i32, i32
  }
}

</mosaic_0001>

<llo_original>
// kernel: tpu_custom_call.1
$region0: #{tpu_custom_call.1}
  #allocation0 [shape = 'u32[]', space=smem, size = 0x4, offset = 0x4, fixed_abs, tag = 'smem constant byte address 0x4 - core index']
  #allocation1 [shape = 'u32[144,128]{1,0:T(1,128)}', space=vmem, size = 0x12000, scoped, tag = 'internal scratch']
  #allocation2 [shape = 'f32[4,16,32]{2,1,0:T(8,128)}', space=vmem, size = 0x8000, scoped, tag = 'scratch operand']
  #allocation3 [shape = 'f32[4,16,32]{2,1,0:T(8,128)}', space=vmem, size = 0x8000, scoped, tag = 'scratch operand']
  #allocation4 [shape = 'bf16[4,16,32]{2,1,0:T(8,128)(2,1)}', space=vmem, size = 0x4000, scoped, tag = 'scratch operand']
  #allocation5 [shape = 'bf16[16,128]{1,0:T(8,128)(2,1)}', space=vmem, size = 0x1000, scoped, tag = 'scratch operand']
  %s0 = inlined_call_operand.hbm [shape: f32[2,16,128], index: 0, kind: input, shape index: {}]
  %s1 = inlined_call_operand.hbm [shape: f32[16,32], index: 1, kind: input, shape index: {}]
  %s2 = inlined_call_operand.hbm [shape: f32[16,32], index: 2, kind: input, shape index: {}]
  %s3 = inlined_call_operand.vmem [shape: f32[1,128], index: 3, kind: input, shape index: {}]
  %s4 = inlined_call_operand.vmem [shape: f32[1,128], index: 4, kind: input, shape index: {}]
  %s5 = inlined_call_operand.hbm [shape: bf16[128,384], index: 5, kind: input, shape index: {}]
  %s6 = inlined_call_operand.vmem [shape: f32[1,128], index: 6, kind: input, shape index: {}]
  %s7 = inlined_call_operand.vmem [shape: f32[1,128], index: 7, kind: input, shape index: {}]
  %s8 = inlined_call_operand.hbm [shape: bf16[128,128], index: 8, kind: input, shape index: {}]
  %s9 = inlined_call_operand.vmem [shape: f32[1,128], index: 9, kind: input, shape index: {}]
  %s10 = inlined_call_operand.vmem [shape: f32[1,128], index: 10, kind: input, shape index: {}]
  %s11 = inlined_call_operand.hbm [shape: bf16[128,512], index: 11, kind: input, shape index: {}]
  %s12 = inlined_call_operand.hbm [shape: bf16[256,128], index: 12, kind: input, shape index: {}]
  %s13 = inlined_call_operand.hbm [shape: f32[2,16,128], index: 13, kind: output, shape index: {}]
  %s14 = sld [smem:[#allocation0]]
  $region113: #{tpu_custom_call.1} parent=0
    _
  %s16 = ssub.s32 1, %s14
  %s17 = scalar_select 0, %s16, %s14
  $region1: #{tpu_custom_call.1} parent=0
    #allocation6 [shape = 'u8[16384]{0}', space=vmem, size = 0x4000, scoped, tag = 'input window, operand 0']
    #allocation7 [shape = 's32[2]{0}', space=sflag, size = 0x8, scoped, tag = 'scoped memory for tpu_custom_call.1']
    #allocation8 [shape = 's32[2]{0}', space=sflag, size = 0x8, scoped, tag = 'scoped memory for tpu_custom_call.1']
    #allocation9 [shape = 'u8[8192]{0}', space=vmem, size = 0x2000, scoped, tag = 'input window, operand 1, single buffered']
    #allocation10 [shape = 's32[1]{0}', space=sflag, size = 0x4, scoped, tag = 'scoped memory for tpu_custom_call.1']
    #allocation11 [shape = 'u8[8192]{0}', space=vmem, size = 0x2000, scoped, tag = 'input window, operand 2, single buffered']
    #allocation12 [shape = 'u8[98304]{0}', space=vmem, size = 0x18000, scoped, tag = 'input window, operand 5, single buffered']
    #allocation13 [shape = 's32[1]{0}', space=sflag, size = 0x4, scoped, tag = 'scoped memory for tpu_custom_call.1']
    #allocation14 [shape = 'u8[32768]{0}', space=vmem, size = 0x8000, scoped, tag = 'input window, operand 8, single buffered']
    #allocation15 [shape = 'u8[131072]{0}', space=vmem, size = 0x20000, scoped, tag = 'input window, operand 11, single buffered']
    #allocation16 [shape = 's32[1]{0}', space=sflag, size = 0x4, scoped, tag = 'scoped memory for tpu_custom_call.1']
    #allocation17 [shape = 'u8[65536]{0}', space=vmem, size = 0x10000, scoped, tag = 'input window, operand 12, single buffered']
    #allocation18 [shape = 'u8[16384]{0}', space=vmem, size = 0x4000, scoped, tag = 'output window, operand 0']
    %18 = vsyncpa [#allocation7], 0
    %s19 = scalar_lea.sflag [#allocation7], 1
    %20 = vsyncpa %s19, 0
    %21 = vsyncpa [#allocation10], 0
    %22 = vsyncpa [#allocation13], 0
    %23 = vsyncpa [#allocation16], 0
    %24 = vsyncpa [#allocation8], 0
    %s25 = scalar_lea.sflag [#allocation8], 1
    %26 = vsyncpa %s25, 0
    loop: start=0, step=1, limit=4
    $region2: #{tpu_custom_call.1} parent=1 // loop_pre_header
      _
    $region3: #{tpu_custom_call.1} parent=1 // loop_header
      %s28 = sphi 0, %s32
      %p29 = scmp.ge.s32.totalorder %s28, 4
      %s38 = sphi 0, %s40
      %s41 = sphi 0, %s38
      %s42 = sphi 0, %s41
      %s58 = sphi 0, %s42
      %s62 = sphi 0, %s62
      %s64 = sphi 0, %s62
      %s65 = sphi 0, %s64
      %s79 = sphi 0, %s65
      %s83 = sphi 0, %s83
      %s85 = sphi 0, %s83
      %s86 = sphi 0, %s85
      %s100 = sphi 0, %s86
      %s104 = sphi 0, %s104
      %s106 = sphi 0, %s104
      %s107 = sphi 0, %s106
      %s121 = sphi 0, %s107
      %s125 = sphi 0, %s125
      %s127 = sphi 0, %s125
      %s128 = sphi 0, %s127
      %s142 = sphi 0, %s128
      %s146 = sphi 0, %s146
      %s148 = sphi 0, %s146
      %s149 = sphi 0, %s148
      %s163 = sphi 0, %s149
      %s167 = sphi 0, %s167
      %s169 = sphi 0, %s167
      %s170 = sphi 0, %s169
      %s184 = sphi 0, %s170
      %s188 = sphi 0, %s188
      %s190 = sphi 0, %s188
      %s191 = sphi 0, %s190
      %s205 = sphi 0, %s191
      %s209 = sphi 0, %s209
      %s211 = sphi 0, %s209
      %s212 = sphi 0, %s211
      %s226 = sphi 0, %s212
      %s230 = sphi 0, %s230
      %s232 = sphi 0, %s230
      %s233 = sphi 0, %s232
      %s247 = sphi 0, %s233
      %s251 = sphi 0, %s251
      %s253 = sphi 0, %s251
      %s254 = sphi 0, %s253
      %s268 = sphi 0, %s254
      %s272 = sphi 0, %s272
      %s274 = sphi 0, %s272
      %s275 = sphi 0, %s274
      %s289 = sphi 0, %s275
      %s293 = sphi 0, %s293
      %s295 = sphi 0, %s293
      %s296 = sphi 0, %s295
      %s310 = sphi 0, %s296
      %s316 = sphi 0, %s318
      %s319 = sphi 0, %s316
      %s320 = sphi 0, %s319
      %s336 = sphi 0, %s320
    $region4: #{tpu_custom_call.1} parent=1 // loop_header_branch
      %31 = sbr.rel (%p29) target = $region8
    $region5: #{tpu_custom_call.1} parent=1 // loop_body
      %s33 = ssub.s32 %s28, 1
      %s34 = ssub.s32 %s28, 2
      %s35 = sadd.s32 %s28, 1
      %s36 = ssub.s32 %s28, %s35
      %p37 = scmp.eq.s32.totalorder %s36, 0
      %s39 = sadd.s32 %s38, 1
      %s40 = scalar_select %p37, %s38, %s39
      %p43 = pneg %p37
      %p44 = scmp.eq.s32.totalorder %s28, 1
      %p45 = por %p43, %p44
      %p46 = scmp.ne.s32.totalorder %s38, %s41
      %p47 = scmp.eq.s32.totalorder %s28, 0
      %p48 = por %p46, %p47
      %p49 = scmp.ne.s32.totalorder %s38, %s41
      %p50 = scmp.eq.s32.totalorder %s33, 1
      %p51 = por %p49, %p50
      %p52 = scmp.ne.s32.totalorder %s41, %s42
      %p53 = scmp.eq.s32.totalorder %s33, 0
      %p54 = por %p52, %p53
      %p55 = scmp.ne.s32.totalorder %s41, %s42
      %p56 = scmp.eq.s32.totalorder %s34, 1
      %p57 = por %p55, %p56
      %p59 = scmp.ne.s32.totalorder %s42, %s58
      %p60 = scmp.eq.s32.totalorder %s34, 0
      %p61 = por %p59, %p60
      %s63 = sadd.s32 %s62, 1
      %p66 = scmp.eq.s32.totalorder %s28, 1
      %p67 = scmp.ne.s32.totalorder %s62, %s64
      %p68 = scmp.eq.s32.totalorder %s28, 0
      %p69 = por %p67, %p68
      %p70 = scmp.ne.s32.totalorder %s62, %s64
      %p71 = scmp.eq.s32.totalorder %s33, 1
      %p72 = por %p70, %p71
      %p73 = scmp.ne.s32.totalorder %s64, %s65
      %p74 = scmp.eq.s32.totalorder %s33, 0
      %p75 = por %p73, %p74
      %p76 = scmp.ne.s32.totalorder %s64, %s65
      %p77 = scmp.eq.s32.totalorder %s34, 1
      %p78 = por %p76, %p77
      %p80 = scmp.ne.s32.totalorder %s65, %s79
      %p81 = scmp.eq.s32.totalorder %s34, 0
      %p82 = por %p80, %p81
      %s84 = sadd.s32 %s83, 1
      %p87 = scmp.eq.s32.totalorder %s28, 1
      %p88 = scmp.ne.s32.totalorder %s83, %s85
      %p89 = scmp.eq.s32.totalorder %s28, 0
      %p90 = por %p88, %p89
      %p91 = scmp.ne.s32.totalorder %s83, %s85
      %p92 = scmp.eq.s32.totalorder %s33, 1
      %p93 = por %p91, %p92
      %p94 = scmp.ne.s32.totalorder %s85, %s86
      %p95 = scmp.eq.s32.totalorder %s33, 0
      %p96 = por %p94, %p95
      %p97 = scmp.ne.s32.totalorder %s85, %s86
      %p98 = scmp.eq.s32.totalorder %s34, 1
      %p99 = por %p97, %p98
      %p101 = scmp.ne.s32.totalorder %s86, %s100
      %p102 = scmp.eq.s32.totalorder %s34, 0
      %p103 = por %p101, %p102
      %s105 = sadd.s32 %s104, 1
      %p108 = scmp.eq.s32.totalorder %s28, 1
      %p109 = scmp.ne.s32.totalorder %s104, %s106
      %p110 = scmp.eq.s32.totalorder %s28, 0
      %p111 = por %p109, %p110
      %p112 = scmp.ne.s32.totalorder %s104, %s106
      %p113 = scmp.eq.s32.totalorder %s33, 1
      %p114 = por %p112, %p113
      %p115 = scmp.ne.s32.totalorder %s106, %s107
      %p116 = scmp.eq.s32.totalorder %s33, 0
      %p117 = por %p115, %p116
      %p118 = scmp.ne.s32.totalorder %s106, %s107
      %p119 = scmp.eq.s32.totalorder %s34, 1
      %p120 = por %p118, %p119
      %p122 = scmp.ne.s32.totalorder %s107, %s121
      %p123 = scmp.eq.s32.totalorder %s34, 0
      %p124 = por %p122, %p123
      %s126 = sadd.s32 %s125, 1
      %p129 = scmp.eq.s32.totalorder %s28, 1
      %p130 = scmp.ne.s32.totalorder %s125, %s127
      %p131 = scmp.eq.s32.totalorder %s28, 0
      %p132 = por %p130, %p131
      %p133 = scmp.ne.s32.totalorder %s125, %s127
      %p134 = scmp.eq.s32.totalorder %s33, 1
      %p135 = por %p133, %p134
      %p136 = scmp.ne.s32.totalorder %s127, %s128
      %p137 = scmp.eq.s32.totalorder %s33, 0
      %p138 = por %p136, %p137
      %p139 = scmp.ne.s32.totalorder %s127, %s128
      %p140 = scmp.eq.s32.totalorder %s34, 1
      %p141 = por %p139, %p140
      %p143 = scmp.ne.s32.totalorder %s128, %s142
      %p144 = scmp.eq.s32.totalorder %s34, 0
      %p145 = por %p143, %p144
      %s147 = sadd.s32 %s146, 1
      %p150 = scmp.eq.s32.totalorder %s28, 1
      %p151 = scmp.ne.s32.totalorder %s146, %s148
      %p152 = scmp.eq.s32.totalorder %s28, 0
      %p153 = por %p151, %p152
      %p154 = scmp.ne.s32.totalorder %s146, %s148
      %p155 = scmp.eq.s32.totalorder %s33, 1
      %p156 = por %p154, %p155
      %p157 = scmp.ne.s32.totalorder %s148, %s149
      %p158 = scmp.eq.s32.totalorder %s33, 0
      %p159 = por %p157, %p158
      %p160 = scmp.ne.s32.totalorder %s148, %s149
      %p161 = scmp.eq.s32.totalorder %s34, 1
      %p162 = por %p160, %p161
      %p164 = scmp.ne.s32.totalorder %s149, %s163
      %p165 = scmp.eq.s32.totalorder %s34, 0
      %p166 = por %p164, %p165
      %s168 = sadd.s32 %s167, 1
      %p171 = scmp.eq.s32.totalorder %s28, 1
      %p172 = scmp.ne.s32.totalorder %s167, %s169
      %p173 = scmp.eq.s32.totalorder %s28, 0
      %p174 = por %p172, %p173
      %p175 = scmp.ne.s32.totalorder %s167, %s169
      %p176 = scmp.eq.s32.totalorder %s33, 1
      %p177 = por %p175, %p176
      %p178 = scmp.ne.s32.totalorder %s169, %s170
      %p179 = scmp.eq.s32.totalorder %s33, 0
      %p180 = por %p178, %p179
      %p181 = scmp.ne.s32.totalorder %s169, %s170
      %p182 = scmp.eq.s32.totalorder %s34, 1
      %p183 = por %p181, %p182
      %p185 = scmp.ne.s32.totalorder %s170, %s184
      %p186 = scmp.eq.s32.totalorder %s34, 0
      %p187 = por %p185, %p186
      %s189 = sadd.s32 %s188, 1
      %p192 = scmp.eq.s32.totalorder %s28, 1
      %p193 = scmp.ne.s32.totalorder %s188, %s190
      %p194 = scmp.eq.s32.totalorder %s28, 0
      %p195 = por %p193, %p194
      %p196 = scmp.ne.s32.totalorder %s188, %s190
      %p197 = scmp.eq.s32.totalorder %s33, 1
      %p198 = por %p196, %p197
      %p199 = scmp.ne.s32.totalorder %s190, %s191
      %p200 = scmp.eq.s32.totalorder %s33, 0
      %p201 = por %p199, %p200
      %p202 = scmp.ne.s32.totalorder %s190, %s191
      %p203 = scmp.eq.s32.totalorder %s34, 1
      %p204 = por %p202, %p203
      %p206 = scmp.ne.s32.totalorder %s191, %s205
      %p207 = scmp.eq.s32.totalorder %s34, 0
      %p208 = por %p206, %p207
      %s210 = sadd.s32 %s209, 1
      %p213 = scmp.eq.s32.totalorder %s28, 1
      %p214 = scmp.ne.s32.totalorder %s209, %s211
      %p215 = scmp.eq.s32.totalorder %s28, 0
      %p216 = por %p214, %p215
      %p217 = scmp.ne.s32.totalorder %s209, %s211
      %p218 = scmp.eq.s32.totalorder %s33, 1
      %p219 = por %p217, %p218
      %p220 = scmp.ne.s32.totalorder %s211, %s212
      %p221 = scmp.eq.s32.totalorder %s33, 0
      %p222 = por %p220, %p221
      %p223 = scmp.ne.s32.totalorder %s211, %s212
      %p224 = scmp.eq.s32.totalorder %s34, 1
      %p225 = por %p223, %p224
      %p227 = scmp.ne.s32.totalorder %s212, %s226
      %p228 = scmp.eq.s32.totalorder %s34, 0
      %p229 = por %p227, %p228
      %s231 = sadd.s32 %s230, 1
      %p234 = scmp.eq.s32.totalorder %s28, 1
      %p235 = scmp.ne.s32.totalorder %s230, %s232
      %p236 = scmp.eq.s32.totalorder %s28, 0
      %p237 = por %p235, %p236
      %p238 = scmp.ne.s32.totalorder %s230, %s232
      %p239 = scmp.eq.s32.totalorder %s33, 1
      %p240 = por %p238, %p239
      %p241 = scmp.ne.s32.totalorder %s232, %s233
      %p242 = scmp.eq.s32.totalorder %s33, 0
      %p243 = por %p241, %p242
      %p244 = scmp.ne.s32.totalorder %s232, %s233
      %p245 = scmp.eq.s32.totalorder %s34, 1
      %p246 = por %p244, %p245
      %p248 = scmp.ne.s32.totalorder %s233, %s247
      %p249 = scmp.eq.s32.totalorder %s34, 0
      %p250 = por %p248, %p249
      %s252 = sadd.s32 %s251, 1
      %p255 = scmp.eq.s32.totalorder %s28, 1
      %p256 = scmp.ne.s32.totalorder %s251, %s253
      %p257 = scmp.eq.s32.totalorder %s28, 0
      %p258 = por %p256, %p257
      %p259 = scmp.ne.s32.totalorder %s251, %s253
      %p260 = scmp.eq.s32.totalorder %s33, 1
      %p261 = por %p259, %p260
      %p262 = scmp.ne.s32.totalorder %s253, %s254
      %p263 = scmp.eq.s32.totalorder %s33, 0
      %p264 = por %p262, %p263
      %p265 = scmp.ne.s32.totalorder %s253, %s254
      %p266 = scmp.eq.s32.totalorder %s34, 1
      %p267 = por %p265, %p266
      %p269 = scmp.ne.s32.totalorder %s254, %s268
      %p270 = scmp.eq.s32.totalorder %s34, 0
      %p271 = por %p269, %p270
      %s273 = sadd.s32 %s272, 1
      %p276 = scmp.eq.s32.totalorder %s28, 1
      %p277 = scmp.ne.s32.totalorder %s272, %s274
      %p278 = scmp.eq.s32.totalorder %s28, 0
      %p279 = por %p277, %p278
      %p280 = scmp.ne.s32.totalorder %s272, %s274
      %p281 = scmp.eq.s32.totalorder %s33, 1
      %p282 = por %p280, %p281
      %p283 = scmp.ne.s32.totalorder %s274, %s275
      %p284 = scmp.eq.s32.totalorder %s33, 0
      %p285 = por %p283, %p284
      %p286 = scmp.ne.s32.totalorder %s274, %s275
      %p287 = scmp.eq.s32.totalorder %s34, 1
      %p288 = por %p286, %p287
      %p290 = scmp.ne.s32.totalorder %s275, %s289
      %p291 = scmp.eq.s32.totalorder %s34, 0
      %p292 = por %p290, %p291
      %s294 = sadd.s32 %s293, 1
      %p297 = scmp.eq.s32.totalorder %s28, 1
      %p298 = scmp.ne.s32.totalorder %s293, %s295
      %p299 = scmp.eq.s32.totalorder %s28, 0
      %p300 = por %p298, %p299
      %p301 = scmp.ne.s32.totalorder %s293, %s295
      %p302 = scmp.eq.s32.totalorder %s33, 1
      %p303 = por %p301, %p302
      %p304 = scmp.ne.s32.totalorder %s295, %s296
      %p305 = scmp.eq.s32.totalorder %s33, 0
      %p306 = por %p304, %p305
      %p307 = scmp.ne.s32.totalorder %s295, %s296
      %p308 = scmp.eq.s32.totalorder %s34, 1
      %p309 = por %p307, %p308
      %p311 = scmp.ne.s32.totalorder %s296, %s310
      %p312 = scmp.eq.s32.totalorder %s34, 0
      %p313 = por %p311, %p312
      %s314 = ssub.s32 %s28, %s35
      %p315 = scmp.eq.s32.totalorder %s314, 0
      %s317 = sadd.s32 %s316, 1
      %s318 = scalar_select %p315, %s316, %s317
      %p321 = pneg %p315
      %p322 = scmp.eq.s32.totalorder %s28, 1
      %p323 = por %p321, %p322
      %p324 = scmp.ne.s32.totalorder %s316, %s319
      %p325 = scmp.eq.s32.totalorder %s28, 0
      %p326 = por %p324, %p325
      %p327 = scmp.ne.s32.totalorder %s316, %s319
      %p328 = scmp.eq.s32.totalorder %s33, 1
      %p329 = por %p327, %p328
      %p330 = scmp.ne.s32.totalorder %s319, %s320
      %p331 = scmp.eq.s32.totalorder %s33, 0
      %p332 = por %p330, %p331
      %p333 = scmp.ne.s32.totalorder %s319, %s320
      %p334 = scmp.eq.s32.totalorder %s34, 1
      %p335 = por %p333, %p334
      %p337 = scmp.ne.s32.totalorder %s320, %s336
      %p338 = scmp.eq.s32.totalorder %s34, 0
      %p339 = por %p337, %p338
      %p340 = scmp.le.s32.totalorder 1, %s28
      %p341 = scmp.lt.s32.totalorder %s28, 3
      %p342 = pnand %p340, %p341
      %p343 = pneg %p342
      // Predicated region
      $region9: #{tpu_custom_call.1} parent=5 // pred_check
        _
      $region10: #{tpu_custom_call.1} parent=5 // pred_check_branch
        %345 = sbr.rel (%p342) target = $region12
      $region11: #{tpu_custom_call.1} parent=5 // pred_region
        %s346 = ssub.s32 %s28, 1
        // Predicated region
        $region13: #{tpu_custom_call.1} parent=11 // pred_check
          %p347 = pneg %p75
        $region14: #{tpu_custom_call.1} parent=11 // pred_check_branch
          %349 = sbr.rel (%p347) target = $region16
        $region15: #{tpu_custom_call.1} parent=11 // pred_region
          %s351 = ssub.s32 256, 256
          %352 = vsyncadd [#allocation10], %s351
          %s353 = sshll.u32 [#allocation9], 4
          %s354 = int_to_ptr.vmem [resolvable:$true] %s353
          %359 = dma.hbm_to_vmem [thread:$0]  %s1, 256, %s354, [#allocation10], 128, 128, 8
        $region16: #{tpu_custom_call.1} parent=11 // pred_fallthru
          _
        // Predicated region
        $region17: #{tpu_custom_call.1} parent=11 // pred_check
          %p360 = pneg %p96
        $region18: #{tpu_custom_call.1} parent=11 // pred_check_branch
          %362 = sbr.rel (%p360) target = $region20
        $region19: #{tpu_custom_call.1} parent=11 // pred_region
          %s364 = ssub.s32 256, 256
          %365 = vsyncadd [#allocation10], %s364
          %s366 = sshll.u32 [#allocation11], 4
          %s367 = int_to_ptr.vmem [resolvable:$true] %s366
          %372 = dma.hbm_to_vmem [thread:$0]  %s2, 256, %s367, [#allocation10], 128, 128, 8
        $region20: #{tpu_custom_call.1} parent=11 // pred_fallthru
          _
        // Predicated region
        $region21: #{tpu_custom_call.1} parent=11 // pred_check
          %p373 = pneg %p117
        $region22: #{tpu_custom_call.1} parent=11 // pred_check_branch
          %375 = sbr.rel (%p373) target = $region24
        $region23: #{tpu_custom_call.1} parent=11 // pred_region
          _
        $region24: #{tpu_custom_call.1} parent=11 // pred_fallthru
          _
        // Predicated region
        $region25: #{tpu_custom_call.1} parent=11 // pred_check
          %p376 = pneg %p138
        $region26: #{tpu_custom_call.1} parent=11 // pred_check_branch
          %378 = sbr.rel (%p376) target = $region28
        $region27: #{tpu_custom_call.1} parent=11 // pred_region
          _
        $region28: #{tpu_custom_call.1} parent=11 // pred_fallthru
          _
        // Predicated region
        $region29: #{tpu_custom_call.1} parent=11 // pred_check
          %p379 = pneg %p159
        $region30: #{tpu_custom_call.1} parent=11 // pred_check_branch
          %381 = sbr.rel (%p379) target = $region32
        $region31: #{tpu_custom_call.1} parent=11 // pred_region
          %s383 = ssub.s32 3072, 3072
          %384 = vsyncadd [#allocation13], %s383
          %s385 = sshll.u32 [#allocation12], 4
          %s386 = int_to_ptr.vmem [resolvable:$true] %s385
          %391 = dma.hbm_to_vmem [thread:$0]  %s5, 3072, %s386, [#allocation13], 192, 192, 12
        $region32: #{tpu_custom_call.1} parent=11 // pred_fallthru
          _
        // Predicated region
        $region33: #{tpu_custom_call.1} parent=11 // pred_check
          %p392 = pneg %p180
        $region34: #{tpu_custom_call.1} parent=11 // pred_check_branch
          %394 = sbr.rel (%p392) target = $region36
        $region35: #{tpu_custom_call.1} parent=11 // pred_region
          _
        $region36: #{tpu_custom_call.1} parent=11 // pred_fallthru
          _
        // Predicated region
        $region37: #{tpu_custom_call.1} parent=11 // pred_check
          %p395 = pneg %p201
        $region38: #{tpu_custom_call.1} parent=11 // pred_check_branch
          %397 = sbr.rel (%p395) target = $region40
        $region39: #{tpu_custom_call.1} parent=11 // pred_region
          _
        $region40: #{tpu_custom_call.1} parent=11 // pred_fallthru
          _
        // Predicated region
        $region41: #{tpu_custom_call.1} parent=11 // pred_check
          %p398 = pneg %p222
        $region42: #{tpu_custom_call.1} parent=11 // pred_check_branch
          %400 = sbr.rel (%p398) target = $region44
        $region43: #{tpu_custom_call.1} parent=11 // pred_region
          %s402 = ssub.s32 1024, 1024
          %403 = vsyncadd [#allocation13], %s402
          %s404 = sshll.u32 [#allocation14], 4
          %s405 = int_to_ptr.vmem [resolvable:$true] %s404
          %410 = dma.hbm_to_vmem [thread:$0]  %s8, 1024, %s405, [#allocation13], 64, 64, 4
        $region44: #{tpu_custom_call.1} parent=11 // pred_fallthru
          _
        // Predicated region
        $region45: #{tpu_custom_call.1} parent=11 // pred_check
          %p411 = pneg %p243
        $region46: #{tpu_custom_call.1} parent=11 // pred_check_branch
          %413 = sbr.rel (%p411) target = $region48
        $region47: #{tpu_custom_call.1} parent=11 // pred_region
          _
        $region48: #{tpu_custom_call.1} parent=11 // pred_fallthru
          _
        // Predicated region
        $region49: #{tpu_custom_call.1} parent=11 // pred_check
          %p414 = pneg %p264
        $region50: #{tpu_custom_call.1} parent=11 // pred_check_branch
          %416 = sbr.rel (%p414) target = $region52
        $region51: #{tpu_custom_call.1} parent=11 // pred_region
          _
        $region52: #{tpu_custom_call.1} parent=11 // pred_fallthru
          _
        // Predicated region
        $region53: #{tpu_custom_call.1} parent=11 // pred_check
          %p417 = pneg %p285
        $region54: #{tpu_custom_call.1} parent=11 // pred_check_branch
          %419 = sbr.rel (%p417) target = $region56
        $region55: #{tpu_custom_call.1} parent=11 // pred_region
          %s421 = ssub.s32 4096, 4096
          %422 = vsyncadd [#allocation16], %s421
          %s423 = sshll.u32 [#allocation15], 4
          %s424 = int_to_ptr.vmem [resolvable:$true] %s423
          %429 = dma.hbm_to_vmem [thread:$0]  %s11, 4096, %s424, [#allocation16], 256, 256, 16
        $region56: #{tpu_custom_call.1} parent=11 // pred_fallthru
          _
        // Predicated region
        $region57: #{tpu_custom_call.1} parent=11 // pred_check
          %p430 = pneg %p306
        $region58: #{tpu_custom_call.1} parent=11 // pred_check_branch
          %432 = sbr.rel (%p430) target = $region60
        $region59: #{tpu_custom_call.1} parent=11 // pred_region
          %s434 = ssub.s32 2048, 2048
          %435 = vsyncadd [#allocation16], %s434
          %s436 = sshll.u32 [#allocation17], 4
          %s437 = int_to_ptr.vmem [resolvable:$true] %s436
          %442 = dma.hbm_to_vmem [thread:$0]  %s12, 2048, %s437, [#allocation16], 64, 64, 4
        $region60: #{tpu_custom_call.1} parent=11 // pred_fallthru
          _
      $region12: #{tpu_custom_call.1} parent=5 // pred_fallthru
        _
      %p443 = scmp.lt.s32.totalorder %s28, 2
      // Predicated region
      $region61: #{tpu_custom_call.1} parent=5 // pred_check
        %p444 = pneg %p443
      $region62: #{tpu_custom_call.1} parent=5 // pred_check_branch
        %446 = sbr.rel (%p444) target = $region64
      $region63: #{tpu_custom_call.1} parent=5 // pred_region
        // Predicated region
        $region65: #{tpu_custom_call.1} parent=63 // pred_check
          %p447 = pneg %p48
        $region66: #{tpu_custom_call.1} parent=63 // pred_check_branch
          %449 = sbr.rel (%p447) target = $region68
        $region67: #{tpu_custom_call.1} parent=63 // pred_region
          %s450 = sand.u32 %s38, 1
          %s451 = scalar_lea.sflag [#allocation7], %s450
          %s452 = sand.u32 %s38, 1
          %s453 = smul.addr %s452, 16
          %s454 = scalar_lea.vmem [#allocation6], %s453
          %s456 = ssub.s32 256, 256
          %457 = vsyncadd %s451, %s456
          %s458 = smul.addr %s28, 2
          %s459 = smul.addr %s458, 128
          %s460 = scalar_lea.hbm %s0, %s459
          %s461 = sshll.u32 %s454, 4
          %s462 = int_to_ptr.vmem [resolvable:$true] %s461
          %467 = dma.hbm_to_vmem [thread:$0]  %s460, 256, %s462, %s451, 128, 128, 8
        $region68: #{tpu_custom_call.1} parent=63 // pred_fallthru
          _
      $region64: #{tpu_custom_call.1} parent=5 // pred_fallthru
        _
      %p468 = scmp.le.s32.totalorder 1, %s28
      %p469 = scmp.lt.s32.totalorder %s28, 3
      %p470 = pnand %p468, %p469
      %p471 = pneg %p470
      // Predicated region
      $region69: #{tpu_custom_call.1} parent=5 // pred_check
        _
      $region70: #{tpu_custom_call.1} parent=5 // pred_check_branch
        %473 = sbr.rel (%p470) target = $region72
      $region71: #{tpu_custom_call.1} parent=5 // pred_region
        %s474 = ssub.s32 %s28, 1
        %s475 = sand.u32 %s41, 1
        %s476 = scalar_lea.sflag [#allocation7], %s475
        %s477 = sand.u32 %s41, 1
        %s478 = smul.addr %s477, 16
        %s479 = scalar_lea.vmem [#allocation6], %s478
        // Predicated region
        $region73: #{tpu_custom_call.1} parent=71 // pred_check
          %p480 = pneg %p54
        $region74: #{tpu_custom_call.1} parent=71 // pred_check_branch
          %482 = sbr.rel (%p480) target = $region76
        $region75: #{tpu_custom_call.1} parent=71 // pred_region
          %483 = dma.done %s476, 256
        $region76: #{tpu_custom_call.1} parent=71 // pred_fallthru
          _
        // Predicated region
        $region77: #{tpu_custom_call.1} parent=71 // pred_check
          %p484 = pneg %p75
        $region78: #{tpu_custom_call.1} parent=71 // pred_check_branch
          %486 = sbr.rel (%p484) target = $region80
        $region79: #{tpu_custom_call.1} parent=71 // pred_region
          %487 = dma.done [#allocation10], 256
        $region80: #{tpu_custom_call.1} parent=71 // pred_fallthru
          _
        // Predicated region
        $region81: #{tpu_custom_call.1} parent=71 // pred_check
          %p488 = pneg %p96
        $region82: #{tpu_custom_call.1} parent=71 // pred_check_branch
          %490 = sbr.rel (%p488) target = $region84
        $region83: #{tpu_custom_call.1} parent=71 // pred_region
          %491 = dma.done [#allocation10], 256
        $region84: #{tpu_custom_call.1} parent=71 // pred_fallthru
          _
        // Predicated region
        $region85: #{tpu_custom_call.1} parent=71 // pred_check
          %p492 = pneg %p159
        $region86: #{tpu_custom_call.1} parent=71 // pred_check_branch
          %494 = sbr.rel (%p492) target = $region88
        $region87: #{tpu_custom_call.1} parent=71 // pred_region
          %495 = dma.done [#allocation13], 3072
        $region88: #{tpu_custom_call.1} parent=71 // pred_fallthru
          _
        // Predicated region
        $region89: #{tpu_custom_call.1} parent=71 // pred_check
          %p496 = pneg %p222
        $region90: #{tpu_custom_call.1} parent=71 // pred_check_branch
          %498 = sbr.rel (%p496) target = $region92
        $region91: #{tpu_custom_call.1} parent=71 // pred_region
          %499 = dma.done [#allocation13], 1024
        $region92: #{tpu_custom_call.1} parent=71 // pred_fallthru
          _
        // Predicated region
        $region93: #{tpu_custom_call.1} parent=71 // pred_check
          %p500 = pneg %p285
        $region94: #{tpu_custom_call.1} parent=71 // pred_check_branch
          %502 = sbr.rel (%p500) target = $region96
        $region95: #{tpu_custom_call.1} parent=71 // pred_region
          %503 = dma.done [#allocation16], 4096
        $region96: #{tpu_custom_call.1} parent=71 // pred_fallthru
          _
        // Predicated region
        $region97: #{tpu_custom_call.1} parent=71 // pred_check
          %p504 = pneg %p306
        $region98: #{tpu_custom_call.1} parent=71 // pred_check_branch
          %506 = sbr.rel (%p504) target = $region100
        $region99: #{tpu_custom_call.1} parent=71 // pred_region
          %507 = dma.done [#allocation16], 2048
        $region100: #{tpu_custom_call.1} parent=71 // pred_fallthru
          _
        %s508 = sand.u32 %s41, 1
        %s509 = scalar_lea.sflag [#allocation7], %s508
        %s510 = sand.u32 %s41, 1
        %s511 = smul.addr %s510, 16
        %s512 = scalar_lea.vmem [#allocation6], %s511
        %p513 = pneg %p54
        %p514 = pneg %p51
        %p515 = pneg %p75
        %p516 = pneg %p72
        %p517 = pneg %p96
        %p518 = pneg %p93
        %p519 = pneg %p117
        %p520 = pneg %p114
        %p521 = pneg %p138
        %p522 = pneg %p135
        %p523 = pneg %p159
        %p524 = pneg %p156
        %p525 = pneg %p180
        %p526 = pneg %p177
        %p527 = pneg %p201
        %p528 = pneg %p198
        %p529 = pneg %p222
        %p530 = pneg %p219
        %p531 = pneg %p243
        %p532 = pneg %p240
        %p533 = pneg %p264
        %p534 = pneg %p261
        %p535 = pneg %p285
        %p536 = pneg %p282
        %p537 = pneg %p306
        %p538 = pneg %p303
        %p539 = pneg %p332
        %p540 = pneg %p329
        %s541 = sand.u32 %s319, 1
        %s542 = scalar_lea.sflag [#allocation8], %s541
        %s543 = sand.u32 %s319, 1
        %s544 = smul.addr %s543, 16
        %s545 = scalar_lea.vmem [#allocation18], %s544
        %v547 = vld [vmem:[%s479] sm:$0xff]
        %v548 = vld [vmem:[%s479 + $0x8] sm:$0xff]
        %v549 = vld [vmem:[%s3] sm:$0x1]
        %v550 = vld [vmem:[%s4] sm:$0x1]
        %551 = vadd.xlane.f32.xlu0 %v547
        %v552 = vpop.xlane.xlu0 %551
        %553 = vadd.xlane.f32.xlu0 %v548
        %v554 = vpop.xlane.xlu0 %553
        %v555 = vrcp.pop 128.0
        %v556 = vmul.f32 %v552, %v555
        %v557 = vmul.f32 %v554, %v555
        %v558 = vsub.f32 %v547, %v556
        %v559 = vsub.f32 %v548, %v557
        %v560 = vmul.f32 %v558, %v558
        %v561 = vmul.f32 %v559, %v559
        %562 = vadd.xlane.f32.xlu0 %v560
        %v563 = vpop.xlane.xlu0 %562
        %564 = vadd.xlane.f32.xlu0 %v561
        %v565 = vpop.xlane.xlu0 %564
        %v566 = vmul.f32 %v563, %v555
        %v567 = vmul.f32 %v565, %v555
        %v568 = vadd.f32 %v566, 1e-05
        %v569 = vadd.f32 %v567, 1e-05
        %v570 = vrsqrt.pop %v568
        %v571 = vrsqrt.pop %v569
        %v572 = vmul.f32 %v558, %v570
        %v573 = vmul.f32 %v559, %v571
        %v575 = vlaneseq
        %v576 = vshrl.u32 %v575, 7
        %v577 = vsub.s32 0, %v576
        %v578 = vrot.slane %v549, %v577
        %v580 = vmul.f32 %v572, %v578
        %v581 = vmul.f32 %v573, %v578
        %v583 = vlaneseq
        %v584 = vshrl.u32 %v583, 7
        %v585 = vsub.s32 0, %v584
        %v586 = vrot.slane %v550, %v585
        %v588 = vadd.f32 %v580, %v586
        %v589 = vadd.f32 %v581, %v586
        %v590 = vpack.c.bf16 %v589, %v588
        %v591 = vld [vmem:[#allocation12] sm:$0xff]
        %v592 = vld [vmem:[#allocation12 + $0x8] sm:$0xf]
        %v593 = vld [vmem:[#allocation12 + $0xc] sm:$0xff]
        %v594 = vld [vmem:[#allocation12 + $0x14] sm:$0xf]
        %v595 = vld [vmem:[#allocation12 + $0x18] sm:$0xff]
        %v596 = vld [vmem:[#allocation12 + $0x20] sm:$0xf]
        %v597 = vld [vmem:[#allocation12 + $0x24] sm:$0xff]
        %v598 = vld [vmem:[#allocation12 + $0x2c] sm:$0xf]
        %v599 = vld [vmem:[#allocation12 + $0x30] sm:$0xff]
        %v600 = vld [vmem:[#allocation12 + $0x38] sm:$0xf]
        %v601 = vld [vmem:[#allocation12 + $0x3c] sm:$0xff]
        %v602 = vld [vmem:[#allocation12 + $0x44] sm:$0xf]
        %v603 = vld [vmem:[#allocation12 + $0x48] sm:$0xff]
        %v604 = vld [vmem:[#allocation12 + $0x50] sm:$0xf]
        %v605 = vld [vmem:[#allocation12 + $0x54] sm:$0xff]
        %v606 = vld [vmem:[#allocation12 + $0x5c] sm:$0xf]
        %v607 = vld [vmem:[#allocation12 + $0x60] sm:$0xff]
        %v608 = vld [vmem:[#allocation12 + $0x68] sm:$0xf]
        %v609 = vld [vmem:[#allocation12 + $0x6c] sm:$0xff]
        %v610 = vld [vmem:[#allocation12 + $0x74] sm:$0xf]
        %v611 = vld [vmem:[#allocation12 + $0x78] sm:$0xff]
        %v612 = vld [vmem:[#allocation12 + $0x80] sm:$0xf]
        %v613 = vld [vmem:[#allocation12 + $0x84] sm:$0xff]
        %v614 = vld [vmem:[#allocation12 + $0x8c] sm:$0xf]
        %v615 = vld [vmem:[#allocation12 + $0x90] sm:$0xff]
        %v616 = vld [vmem:[#allocation12 + $0x98] sm:$0xf]
        %v617 = vld [vmem:[#allocation12 + $0x9c] sm:$0xff]
        %v618 = vld [vmem:[#allocation12 + $0xa4] sm:$0xf]
        %v619 = vld [vmem:[#allocation12 + $0xa8] sm:$0xff]
        %v620 = vld [vmem:[#allocation12 + $0xb0] sm:$0xf]
        %v621 = vld [vmem:[#allocation12 + $0xb4] sm:$0xff]
        %v622 = vld [vmem:[#allocation12 + $0xbc] sm:$0xf]
        %v655 = vunpack.c.l.b16 %v591
        %v656 = vunpack.c.h.b16 %v591
        %v657 = vunpack.c.l.b16 %v592
        %v658 = vunpack.c.l.b16 %v593
        %v659 = vunpack.c.h.b16 %v593
        %v660 = vunpack.c.l.b16 %v594
        %v661 = vunpack.c.l.b16 %v595
        %v662 = vunpack.c.h.b16 %v595
        %v663 = vunpack.c.l.b16 %v596
        %v664 = vunpack.c.l.b16 %v597
        %v665 = vunpack.c.h.b16 %v597
        %v666 = vunpack.c.l.b16 %v598
        %v667 = vunpack.c.l.b16 %v599
        %v668 = vunpack.c.h.b16 %v599
        %v669 = vunpack.c.l.b16 %v600
        %v670 = vunpack.c.l.b16 %v601
        %v671 = vunpack.c.h.b16 %v601
        %v672 = vunpack.c.l.b16 %v602
        %v673 = vunpack.c.l.b16 %v603
        %v674 = vunpack.c.h.b16 %v603
        %v675 = vunpack.c.l.b16 %v604
        %v676 = vunpack.c.l.b16 %v605
        %v677 = vunpack.c.h.b16 %v605
        %v678 = vunpack.c.l.b16 %v606
        %v679 = vunpack.c.l.b16 %v607
        %v680 = vunpack.c.h.b16 %v607
        %v681 = vunpack.c.l.b16 %v608
        %v682 = vunpack.c.l.b16 %v609
        %v683 = vunpack.c.h.b16 %v609
        %v684 = vunpack.c.l.b16 %v610
        %v685 = vunpack.c.l.b16 %v611
        %v686 = vunpack.c.h.b16 %v611
        %v687 = vunpack.c.l.b16 %v612
        %v688 = vunpack.c.l.b16 %v613
        %v689 = vunpack.c.h.b16 %v613
        %v690 = vunpack.c.l.b16 %v614
        %v691 = vunpack.c.l.b16 %v615
        %v692 = vunpack.c.h.b16 %v615
        %v693 = vunpack.c.l.b16 %v616
        %v694 = vunpack.c.l.b16 %v617
        %v695 = vunpack.c.h.b16 %v617
        %v696 = vunpack.c.l.b16 %v618
        %v697 = vunpack.c.l.b16 %v619
        %v698 = vunpack.c.h.b16 %v619
        %v699 = vunpack.c.l.b16 %v620
        %v700 = vunpack.c.l.b16 %v621
        %v701 = vunpack.c.h.b16 %v621
        %v702 = vunpack.c.l.b16 %v622
        %v703 = vpack.c.b16 %v658, %v655
        %v704 = vpack.c.b16 %v659, %v656
        %v705 = vpack.c.b16 %v660, %v657
        %v706 = vpack.c.b16 %v664, %v661
        %v707 = vpack.c.b16 %v665, %v662
        %v708 = vpack.c.b16 %v666, %v663
        %v709 = vpack.c.b16 %v670, %v667
        %v710 = vpack.c.b16 %v671, %v668
        %v711 = vpack.c.b16 %v672, %v669
        %v712 = vpack.c.b16 %v676, %v673
        %v713 = vpack.c.b16 %v677, %v674
        %v714 = vpack.c.b16 %v678, %v675
        %v715 = vpack.c.b16 %v682, %v679
        %v716 = vpack.c.b16 %v683, %v680
        %v717 = vpack.c.b16 %v684, %v681
        %v718 = vpack.c.b16 %v688, %v685
        %v719 = vpack.c.b16 %v689, %v686
        %v720 = vpack.c.b16 %v690, %v687
        %v721 = vpack.c.b16 %v694, %v691
        %v722 = vpack.c.b16 %v695, %v692
        %v723 = vpack.c.b16 %v696, %v693
        %v724 = vpack.c.b16 %v700, %v697
        %v725 = vpack.c.b16 %v701, %v698
        %v726 = vpack.c.b16 %v702, %v699
        %751 = vmatprep.subr.bf16.mxu0 %v725
        %752 = vmatpush1.bf16.msra.mxu0 %v724
        %753 = vmatprep.subr.bf16.mxu0 %v722
        %754 = vmatpush1.bf16.msra.mxu0 %v721
        %755 = vmatprep.subr.bf16.mxu0 %v719
        %756 = vmatpush1.bf16.msra.mxu0 %v718
        %757 = vmatprep.subr.bf16.mxu0 %v716
        %758 = vmatpush1.bf16.msra.mxu0 %v715
        %759 = vmatprep.subr.bf16.mxu0 %v713
        %760 = vmatpush1.bf16.msra.mxu0 %v712
        %761 = vmatprep.subr.bf16.mxu0 %v710
        %762 = vmatpush1.bf16.msra.mxu0 %v709
        %763 = vmatprep.subr.bf16.mxu0 %v707
        %764 = vmatpush1.bf16.msra.mxu0 %v706
        %765 = vmatprep.subr.bf16.mxu0 %v704
        %766 = vmatpush1.bf16.msra.mxu0 %v703
        %767 = vmatprep.subr.bf16.mxu0 0
        %768 = vmatpush2.bf16.msra.mxu0 0
        %769 = vmatprep.subr.bf16.mxu0 0
        %770 = vmatpush2.bf16.msra.mxu0 0
        %771 = vmatprep.subr.bf16.mxu0 0
        %772 = vmatpush2.bf16.msra.mxu0 0
        %773 = vmatprep.subr.bf16.mxu0 0
        %774 = vmatpush2.bf16.msra.mxu0 0
        %775 = vmatprep.subr.bf16.mxu0 0
        %776 = vmatpush2.bf16.msra.mxu0 0
        %777 = vmatprep.subr.bf16.mxu0 0
        %778 = vmatpush2.bf16.msra.mxu0 0
        %779 = vmatprep.subr.bf16.mxu0 0
        %780 = vmatpush2.bf16.msra.mxu0 0
        %781 = vmatprep.subr.bf16.mxu0 0
        %782 = vmatpush2.bf16.msra.mxu0 0
        %783 = vmatprep.mubr.bf16.mxu0 0
        %784 = vmatmul.mubr.bf16.gmra.mxu0 %v590
        %v785 = vpop.f32.mrf.mxu0
        %v786 = vadd.f32 0.0, %v785
        %v787 = vpop.f32.mrf.mxu0
        %v788 = vadd.f32 0.0, %v787
        %v789 = vpop.f32.mrf.mxu0
        %v790 = vadd.f32 0.0, %v789
        %v791 = vpop.f32.mrf.mxu0
        %v792 = vadd.f32 0.0, %v791
        %793 = vdwg.mxu0
        %794 = vmatprep.subr.bf16.mxu0 0
        %795 = vmatpush1.bf16.msra.mxu0 %v726
        %796 = vmatprep.subr.bf16.mxu0 0
        %797 = vmatpush1.bf16.msra.mxu0 %v723
        %798 = vmatprep.subr.bf16.mxu0 0
        %799 = vmatpush1.bf16.msra.mxu0 %v720
        %800 = vmatprep.subr.bf16.mxu0 0
        %801 = vmatpush1.bf16.msra.mxu0 %v717
        %802 = vmatprep.subr.bf16.mxu0 0
        %803 = vmatpush1.bf16.msra.mxu0 %v714
        %804 = vmatprep.subr.bf16.mxu0 0
        %805 = vmatpush1.bf16.msra.mxu0 %v711
        %806 = vmatprep.subr.bf16.mxu0 0
        %807 = vmatpush1.bf16.msra.mxu0 %v708
        %808 = vmatprep.subr.bf16.mxu0 0
        %809 = vmatpush1.bf16.msra.mxu0 %v705
        %810 = vmatprep.subr.bf16.mxu0 0
        %811 = vmatpush2.bf16.msra.mxu0 0
        %812 = vmatprep.subr.bf16.mxu0 0
        %813 = vmatpush2.bf16.msra.mxu0 0
        %814 = vmatprep.subr.bf16.mxu0 0
        %815 = vmatpush2.bf16.msra.mxu0 0
        %816 = vmatprep.subr.bf16.mxu0 0
        %817 = vmatpush2.bf16.msra.mxu0 0
        %818 = vmatprep.subr.bf16.mxu0 0
        %819 = vmatpush2.bf16.msra.mxu0 0
        %820 = vmatprep.subr.bf16.mxu0 0
        %821 = vmatpush2.bf16.msra.mxu0 0
        %822 = vmatprep.subr.bf16.mxu0 0
        %823 = vmatpush2.bf16.msra.mxu0 0
        %824 = vmatprep.subr.bf16.mxu0 0
        %825 = vmatpush2.bf16.msra.mxu0 0
        %826 = vmatprep.mubr.bf16.mxu0 0
        %827 = vmatmul.mubr.bf16.gmra.mxu0 %v590
        %v828 = vpop.f32.mrf.mxu0
        %v829 = vadd.f32 0.0, %v828
        %v830 = vpop.f32.mrf.mxu0
        %v831 = vpop.f32.mrf.mxu0
        %v832 = vadd.f32 0.0, %v831
        %v833 = vpop.f32.mrf.mxu0
        %834 = vdwg.mxu0
        %v835 = vld [vmem:[%s6] sm:$0x1]
        %836 = vadd.xlane.f32.xlu0 %v786
        %v837 = vpop.xlane.xlu0 %836
        %838 = vadd.xlane.f32.xlu0 %v790
        %v839 = vpop.xlane.xlu0 %838
        %v840 = vmul.f32 %v837, %v555
        %v841 = vmul.f32 %v839, %v555
        %v842 = vsub.f32 %v786, %v840
        %v843 = vsub.f32 %v790, %v841
        %v844 = vmul.f32 %v842, %v842
        %v845 = vmul.f32 %v843, %v843
        %846 = vadd.xlane.f32.xlu0 %v844
        %v847 = vpop.xlane.xlu0 %846
        %848 = vadd.xlane.f32.xlu0 %v845
        %v849 = vpop.xlane.xlu0 %848
        %v850 = vmul.f32 %v847, %v555
        %v851 = vmul.f32 %v849, %v555
        %v852 = vadd.f32 %v850, 1e-05
        %v853 = vadd.f32 %v851, 1e-05
        %v854 = vrsqrt.pop %v852
        %v855 = vrsqrt.pop %v853
        %v856 = vmul.f32 %v842, %v854
        %v857 = vmul.f32 %v843, %v855
        %v859 = vlaneseq
        %v860 = vshrl.u32 %v859, 7
        %v861 = vsub.s32 0, %v860
        %v862 = vrot.slane %v835, %v861
        %v864 = vmul.f32 %v856, %v862
        %v865 = vmul.f32 %v857, %v862
        %v866 = vld [vmem:[%s7] sm:$0x1]
        %867 = vadd.xlane.f32.xlu0 %v788
        %v868 = vpop.xlane.xlu0 %867
        %869 = vadd.xlane.f32.xlu0 %v792
        %v870 = vpop.xlane.xlu0 %869
        %v871 = vmul.f32 %v868, %v555
        %v872 = vmul.f32 %v870, %v555
        %v873 = vsub.f32 %v788, %v871
        %v874 = vsub.f32 %v792, %v872
        %v875 = vmul.f32 %v873, %v873
        %v876 = vmul.f32 %v874, %v874
        %877 = vadd.xlane.f32.xlu0 %v875
        %v878 = vpop.xlane.xlu0 %877
        %879 = vadd.xlane.f32.xlu0 %v876
        %v880 = vpop.xlane.xlu0 %879
        %v881 = vmul.f32 %v878, %v555
        %v882 = vmul.f32 %v880, %v555
        %v883 = vadd.f32 %v881, 1e-05
        %v884 = vadd.f32 %v882, 1e-05
        %v885 = vrsqrt.pop %v883
        %v886 = vrsqrt.pop %v884
        %v887 = vmul.f32 %v873, %v885
        %v888 = vmul.f32 %v874, %v886
        %v890 = vlaneseq
        %v891 = vshrl.u32 %v890, 7
        %v892 = vsub.s32 0, %v891
        %v893 = vrot.slane %v866, %v892
        %v895 = vmul.f32 %v887, %v893
        %v896 = vmul.f32 %v888, %v893
        %vm897 = vcmask 261120
        %898 = vst.msk [vmem:[#allocation2] sm:$0xff] %vm897, %v864
        %899 = vst.msk [vmem:[#allocation2 + $0x8] sm:$0xff] %vm897, %v865
        %900 = vst.msk [vmem:[#allocation3] sm:$0xff] %vm897, %v895
        %901 = vst.msk [vmem:[#allocation3 + $0x8] sm:$0xff] %vm897, %v896
        %v902 = vpack.c.bf16 %v832, %v829
        %v904 = vunpack.c.l.b16 %v902
        %v905 = vunpack.c.h.b16 %v902
        %v906 = vpack.c.b16 %v904, %v904
        %v907 = vpack.c.b16 %v905, %v905
        %vm910 = vcmask 257024
        %911 = vst.msk [vmem:[#allocation4] sm:$0xf] %vm910, %v906
        %912 = vst.msk [vmem:[#allocation4 + $0x4] sm:$0xf] %vm910, %v907
        %915 = vrot.lane.b32.xlu0 %v864, 96
        %v916 = vpop.permute.xlu0 %915
        %917 = vrot.lane.b32.xlu0 %v865, 96
        %v918 = vpop.permute.xlu0 %917
        %s921 = scalar_lea.vmem [#allocation2], 16
        %922 = vst.msk [vmem:[%s921] sm:$0xff] %vm897, %v916
        %923 = vst.msk [vmem:[%s921 + $0x8] sm:$0xff] %vm897, %v918
        %926 = vrot.lane.b32.xlu0 %v895, 96
        %v927 = vpop.permute.xlu0 %926
        %928 = vrot.lane.b32.xlu0 %v896, 96
        %v929 = vpop.permute.xlu0 %928
        %s932 = scalar_lea.vmem [#allocation3], 16
        %933 = vst.msk [vmem:[%s932] sm:$0xff] %vm897, %v927
        %934 = vst.msk [vmem:[%s932 + $0x8] sm:$0xff] %vm897, %v929
        %935 = vrot.lane.b32.xlu0 %v906, 96
        %v936 = vpop.permute.xlu0 %935
        %937 = vrot.lane.b32.xlu0 %v907, 96
        %v938 = vpop.permute.xlu0 %937
        %s941 = scalar_lea.vmem [#allocation4], 8
        %942 = vst.msk [vmem:[%s941] sm:$0xf] %vm910, %v936
        %943 = vst.msk [vmem:[%s941 + $0x4] sm:$0xf] %vm910, %v938
        %944 = vrot.lane.b32.xlu0 %v864, 64
        %v945 = vpop.permute.xlu0 %944
        %946 = vrot.lane.b32.xlu0 %v865, 64
        %v947 = vpop.permute.xlu0 %946
        %s950 = scalar_lea.vmem [#allocation2], 32
        %951 = vst.msk [vmem:[%s950] sm:$0xff] %vm897, %v945
        %952 = vst.msk [vmem:[%s950 + $0x8] sm:$0xff] %vm897, %v947
        %953 = vrot.lane.b32.xlu0 %v895, 64
        %v954 = vpop.permute.xlu0 %953
        %955 = vrot.lane.b32.xlu0 %v896, 64
        %v956 = vpop.permute.xlu0 %955
        %s959 = scalar_lea.vmem [#allocation3], 32
        %960 = vst.msk [vmem:[%s959] sm:$0xff] %vm897, %v954
        %961 = vst.msk [vmem:[%s959 + $0x8] sm:$0xff] %vm897, %v956
        %962 = vrot.lane.b32.xlu0 %v906, 64
        %v963 = vpop.permute.xlu0 %962
        %964 = vrot.lane.b32.xlu0 %v907, 64
        %v965 = vpop.permute.xlu0 %964
        %s968 = scalar_lea.vmem [#allocation4], 16
        %969 = vst.msk [vmem:[%s968] sm:$0xf] %vm910, %v963
        %970 = vst.msk [vmem:[%s968 + $0x4] sm:$0xf] %vm910, %v965
        %971 = vrot.lane.b32.xlu0 %v864, 32
        %v972 = vpop.permute.xlu0 %971
        %973 = vrot.lane.b32.xlu0 %v865, 32
        %v974 = vpop.permute.xlu0 %973
        %s977 = scalar_lea.vmem [#allocation2], 48
        %978 = vst.msk [vmem:[%s977] sm:$0xff] %vm897, %v972
        %979 = vst.msk [vmem:[%s977 + $0x8] sm:$0xff] %vm897, %v974
        %980 = vrot.lane.b32.xlu0 %v895, 32
        %v981 = vpop.permute.xlu0 %980
        %982 = vrot.lane.b32.xlu0 %v896, 32
        %v983 = vpop.permute.xlu0 %982
        %s986 = scalar_lea.vmem [#allocation3], 48
        %987 = vst.msk [vmem:[%s986] sm:$0xff] %vm897, %v981
        %988 = vst.msk [vmem:[%s986 + $0x8] sm:$0xff] %vm897, %v983
        %989 = vrot.lane.b32.xlu0 %v906, 32
        %v990 = vpop.permute.xlu0 %989
        %991 = vrot.lane.b32.xlu0 %v907, 32
        %v992 = vpop.permute.xlu0 %991
        %s995 = scalar_lea.vmem [#allocation4], 24
        %996 = vst.msk [vmem:[%s995] sm:$0xf] %vm910, %v990
        %997 = vst.msk [vmem:[%s995 + $0x4] sm:$0xf] %vm910, %v992
        %v998 = vld [vmem:[#allocation9] sm:$0xff]
        %v999 = vld [vmem:[#allocation9 + $0x8] sm:$0xff]
        %v1000 = vld [vmem:[#allocation11] sm:$0xff]
        %v1001 = vld [vmem:[#allocation11 + $0x8] sm:$0xff]
        %v1002 = vld [vmem:[#allocation2] sm:$0xff]
        %v1003 = vld [vmem:[#allocation2 + $0x8] sm:$0xff]
        %v1004 = vld [vmem:[#allocation2 + $0x10] sm:$0xff]
        %v1005 = vld [vmem:[#allocation2 + $0x18] sm:$0xff]
        %v1006 = vld [vmem:[#allocation2 + $0x20] sm:$0xff]
        %v1007 = vld [vmem:[#allocation2 + $0x28] sm:$0xff]
        %v1008 = vld [vmem:[#allocation2 + $0x30] sm:$0xff]
        %v1009 = vld [vmem:[#allocation2 + $0x38] sm:$0xff]
        %v1010 = vld [vmem:[#allocation3] sm:$0xff]
        %v1011 = vld [vmem:[#allocation3 + $0x8] sm:$0xff]
        %v1012 = vld [vmem:[#allocation3 + $0x10] sm:$0xff]
        %v1013 = vld [vmem:[#allocation3 + $0x18] sm:$0xff]
        %v1014 = vld [vmem:[#allocation3 + $0x20] sm:$0xff]
        %v1015 = vld [vmem:[#allocation3 + $0x28] sm:$0xff]
        %v1016 = vld [vmem:[#allocation3 + $0x30] sm:$0xff]
        %v1017 = vld [vmem:[#allocation3 + $0x38] sm:$0xff]
        %v1018 = vmul.f32 %v1002, %v998
        %v1019 = vmul.f32 %v1003, %v999
        %v1020 = vmul.f32 %v1004, %v998
        %v1021 = vmul.f32 %v1005, %v999
        %v1022 = vmul.f32 %v1006, %v998
        %v1023 = vmul.f32 %v1007, %v999
        %v1024 = vmul.f32 %v1008, %v998
        %v1025 = vmul.f32 %v1009, %v999
        %vm1026 = vcmask 1047808
        %1027 = vrot.lane.b32.xlu0 %v1002, 32
        %v1028 = vpop.permute.xlu0 %1027
        %v1029 = vsel %vm1026, %v1028, %v1002
        %1030 = vrot.lane.b32.xlu0 %v1003, 32
        %v1031 = vpop.permute.xlu0 %1030
        %v1032 = vsel %vm1026, %v1031, %v1003
        %1033 = vrot.lane.b32.xlu0 %v1004, 32
        %v1034 = vpop.permute.xlu0 %1033
        %v1035 = vsel %vm1026, %v1034, %v1004
        %1036 = vrot.lane.b32.xlu0 %v1005, 32
        %v1037 = vpop.permute.xlu0 %1036
        %v1038 = vsel %vm1026, %v1037, %v1005
        %1039 = vrot.lane.b32.xlu0 %v1006, 32
        %v1040 = vpop.permute.xlu0 %1039
        %v1041 = vsel %vm1026, %v1040, %v1006
        %1042 = vrot.lane.b32.xlu0 %v1007, 32
        %v1043 = vpop.permute.xlu0 %1042
        %v1044 = vsel %vm1026, %v1043, %v1007
        %1045 = vrot.lane.b32.xlu0 %v1008, 32
        %v1046 = vpop.permute.xlu0 %1045
        %v1047 = vsel %vm1026, %v1046, %v1008
        %1048 = vrot.lane.b32.xlu0 %v1009, 32
        %v1049 = vpop.permute.xlu0 %1048
        %v1050 = vsel %vm1026, %v1049, %v1009
        %1051 = vrot.lane.b32.xlu0 %v1029, 32
        %v1052 = vpop.permute.xlu0 %1051
        %1053 = vrot.lane.b32.xlu0 %v1032, 32
        %v1054 = vpop.permute.xlu0 %1053
        %1055 = vrot.lane.b32.xlu0 %v1035, 32
        %v1056 = vpop.permute.xlu0 %1055
        %1057 = vrot.lane.b32.xlu0 %v1038, 32
        %v1058 = vpop.permute.xlu0 %1057
        %1059 = vrot.lane.b32.xlu0 %v1041, 32
        %v1060 = vpop.permute.xlu0 %1059
        %1061 = vrot.lane.b32.xlu0 %v1044, 32
        %v1062 = vpop.permute.xlu0 %1061
        %1063 = vrot.lane.b32.xlu0 %v1047, 32
        %v1064 = vpop.permute.xlu0 %1063
        %1065 = vrot.lane.b32.xlu0 %v1050, 32
        %v1066 = vpop.permute.xlu0 %1065
        %v1067 = vsel %vm1026, %v1052, %v1002
        %v1068 = vsel %vm1026, %v1054, %v1003
        %v1069 = vsel %vm1026, %v1056, %v1004
        %v1070 = vsel %vm1026, %v1058, %v1005
        %v1071 = vsel %vm1026, %v1060, %v1006
        %v1072 = vsel %vm1026, %v1062, %v1007
        %v1073 = vsel %vm1026, %v1064, %v1008
        %v1074 = vsel %vm1026, %v1066, %v1009
        %1077 = vrot.lane.b32.xlu0 %v1000, 16
        %v1078 = vpop.permute.xlu0 %1077
        %1079 = vrot.lane.b32.xlu0 %v1001, 16
        %v1080 = vpop.permute.xlu0 %1079
        %v1083 = vmul.f32 %v1067, %v1078
        %v1084 = vmul.f32 %v1068, %v1080
        %v1085 = vmul.f32 %v1069, %v1078
        %v1086 = vmul.f32 %v1070, %v1080
        %v1087 = vmul.f32 %v1071, %v1078
        %v1088 = vmul.f32 %v1072, %v1080
        %v1089 = vmul.f32 %v1073, %v1078
        %v1090 = vmul.f32 %v1074, %v1080
        %1099 = vrot.lane.b32.xlu0 %v1083, 112
        %v1100 = vpop.permute.xlu0 %1099
        %1101 = vrot.lane.b32.xlu0 %v1084, 112
        %v1102 = vpop.permute.xlu0 %1101
        %1103 = vrot.lane.b32.xlu0 %v1085, 112
        %v1104 = vpop.permute.xlu0 %1103
        %1105 = vrot.lane.b32.xlu0 %v1086, 112
        %v1106 = vpop.permute.xlu0 %1105
        %1107 = vrot.lane.b32.xlu0 %v1087, 112
        %v1108 = vpop.permute.xlu0 %1107
        %1109 = vrot.lane.b32.xlu0 %v1088, 112
        %v1110 = vpop.permute.xlu0 %1109
        %1111 = vrot.lane.b32.xlu0 %v1089, 112
        %v1112 = vpop.permute.xlu0 %1111
        %1113 = vrot.lane.b32.xlu0 %v1090, 112
        %v1114 = vpop.permute.xlu0 %1113
        %v1123 = vadd.f32 %v1018, %v1100
        %v1124 = vadd.f32 %v1019, %v1102
        %v1125 = vadd.f32 %v1020, %v1104
        %v1126 = vadd.f32 %v1021, %v1106
        %v1127 = vadd.f32 %v1022, %v1108
        %v1128 = vadd.f32 %v1023, %v1110
        %v1129 = vadd.f32 %v1024, %v1112
        %v1130 = vadd.f32 %v1025, %v1114
        %v1131 = vpack.c.bf16 %v1124, %v1123
        %v1132 = vpack.c.bf16 %v1126, %v1125
        %v1133 = vpack.c.bf16 %v1128, %v1127
        %v1134 = vpack.c.bf16 %v1130, %v1129
        %v1135 = vmul.f32 %v1010, %v998
        %v1136 = vmul.f32 %v1011, %v999
        %v1137 = vmul.f32 %v1012, %v998
        %v1138 = vmul.f32 %v1013, %v999
        %v1139 = vmul.f32 %v1014, %v998
        %v1140 = vmul.f32 %v1015, %v999
        %v1141 = vmul.f32 %v1016, %v998
        %v1142 = vmul.f32 %v1017, %v999
        %1143 = vrot.lane.b32.xlu0 %v1010, 32
        %v1144 = vpop.permute.xlu0 %1143
        %v1145 = vsel %vm1026, %v1144, %v1010
        %1146 = vrot.lane.b32.xlu0 %v1011, 32
        %v1147 = vpop.permute.xlu0 %1146
        %v1148 = vsel %vm1026, %v1147, %v1011
        %1149 = vrot.lane.b32.xlu0 %v1012, 32
        %v1150 = vpop.permute.xlu0 %1149
        %v1151 = vsel %vm1026, %v1150, %v1012
        %1152 = vrot.lane.b32.xlu0 %v1013, 32
        %v1153 = vpop.permute.xlu0 %1152
        %v1154 = vsel %vm1026, %v1153, %v1013
        %1155 = vrot.lane.b32.xlu0 %v1014, 32
        %v1156 = vpop.permute.xlu0 %1155
        %v1157 = vsel %vm1026, %v1156, %v1014
        %1158 = vrot.lane.b32.xlu0 %v1015, 32
        %v1159 = vpop.permute.xlu0 %1158
        %v1160 = vsel %vm1026, %v1159, %v1015
        %1161 = vrot.lane.b32.xlu0 %v1016, 32
        %v1162 = vpop.permute.xlu0 %1161
        %v1163 = vsel %vm1026, %v1162, %v1016
        %1164 = vrot.lane.b32.xlu0 %v1017, 32
        %v1165 = vpop.permute.xlu0 %1164
        %v1166 = vsel %vm1026, %v1165, %v1017
        %1167 = vrot.lane.b32.xlu0 %v1145, 32
        %v1168 = vpop.permute.xlu0 %1167
        %1169 = vrot.lane.b32.xlu0 %v1148, 32
        %v1170 = vpop.permute.xlu0 %1169
        %1171 = vrot.lane.b32.xlu0 %v1151, 32
        %v1172 = vpop.permute.xlu0 %1171
        %1173 = vrot.lane.b32.xlu0 %v1154, 32
        %v1174 = vpop.permute.xlu0 %1173
        %1175 = vrot.lane.b32.xlu0 %v1157, 32
        %v1176 = vpop.permute.xlu0 %1175
        %1177 = vrot.lane.b32.xlu0 %v1160, 32
        %v1178 = vpop.permute.xlu0 %1177
        %1179 = vrot.lane.b32.xlu0 %v1163, 32
        %v1180 = vpop.permute.xlu0 %1179
        %1181 = vrot.lane.b32.xlu0 %v1166, 32
        %v1182 = vpop.permute.xlu0 %1181
        %v1183 = vsel %vm1026, %v1168, %v1010
        %v1184 = vsel %vm1026, %v1170, %v1011
        %v1185 = vsel %vm1026, %v1172, %v1012
        %v1186 = vsel %vm1026, %v1174, %v1013
        %v1187 = vsel %vm1026, %v1176, %v1014
        %v1188 = vsel %vm1026, %v1178, %v1015
        %v1189 = vsel %vm1026, %v1180, %v1016
        %v1190 = vsel %vm1026, %v1182, %v1017
        %v1191 = vmul.f32 %v1183, %v1078
        %v1192 = vmul.f32 %v1184, %v1080
        %v1193 = vmul.f32 %v1185, %v1078
        %v1194 = vmul.f32 %v1186, %v1080
        %v1195 = vmul.f32 %v1187, %v1078
        %v1196 = vmul.f32 %v1188, %v1080
        %v1197 = vmul.f32 %v1189, %v1078
        %v1198 = vmul.f32 %v1190, %v1080
        %1207 = vrot.lane.b32.xlu0 %v1191, 112
        %v1208 = vpop.permute.xlu0 %1207
        %1209 = vrot.lane.b32.xlu0 %v1192, 112
        %v1210 = vpop.permute.xlu0 %1209
        %1211 = vrot.lane.b32.xlu0 %v1193, 112
        %v1212 = vpop.permute.xlu0 %1211
        %1213 = vrot.lane.b32.xlu0 %v1194, 112
        %v1214 = vpop.permute.xlu0 %1213
        %1215 = vrot.lane.b32.xlu0 %v1195, 112
        %v1216 = vpop.permute.xlu0 %1215
        %1217 = vrot.lane.b32.xlu0 %v1196, 112
        %v1218 = vpop.permute.xlu0 %1217
        %1219 = vrot.lane.b32.xlu0 %v1197, 112
        %v1220 = vpop.permute.xlu0 %1219
        %1221 = vrot.lane.b32.xlu0 %v1198, 112
        %v1222 = vpop.permute.xlu0 %1221
        %v1231 = vadd.f32 %v1135, %v1208
        %v1232 = vadd.f32 %v1136, %v1210
        %v1233 = vadd.f32 %v1137, %v1212
        %v1234 = vadd.f32 %v1138, %v1214
        %v1235 = vadd.f32 %v1139, %v1216
        %v1236 = vadd.f32 %v1140, %v1218
        %v1237 = vadd.f32 %v1141, %v1220
        %v1238 = vadd.f32 %v1142, %v1222
        %v1239 = vpack.c.bf16 %v1232, %v1231
        %v1240 = vpack.c.bf16 %v1234, %v1233
        %v1241 = vpack.c.bf16 %v1236, %v1235
        %v1242 = vpack.c.bf16 %v1238, %v1237
        %v1244 = vsel %vm897, %v1131, 0
        %v1247 = vsel %vm897, %v1239, 0
        %1249 = vmatprep.subr.bf16.mxu0 0
        %1250 = vmatpush1.bf16.xpose.msra.mxu0 0
        %1251 = vmatprep.subr.bf16.mxu0 0
        %1252 = vmatpush1.bf16.xpose.msra.mxu0 0
        %1253 = vmatprep.subr.bf16.mxu0 0
        %1254 = vmatpush1.bf16.xpose.msra.mxu0 0
        %1255 = vmatprep.subr.bf16.mxu0 0
        %1256 = vmatpush1.bf16.xpose.msra.mxu0 0
        %1257 = vmatprep.subr.bf16.mxu0 0
        %1258 = vmatpush1.bf16.xpose.msra.mxu0 0
        %1259 = vmatprep.subr.bf16.mxu0 0
        %1260 = vmatpush1.bf16.xpose.msra.mxu0 0
        %1261 = vmatprep.subr.bf16.mxu0 0
        %1262 = vmatpush1.bf16.xpose.msra.mxu0 0
        %1263 = vmatprep.subr.bf16.mxu0 0
        %1264 = vmatpush1.bf16.xpose.msra.mxu0 %v1247
        %1265 = vmatprep.subr.bf16.mxu0 0
        %1266 = vmatpush2.bf16.xpose.msra.mxu0 0
        %1267 = vmatprep.subr.bf16.mxu0 0
        %1268 = vmatpush2.bf16.xpose.msra.mxu0 0
        %1269 = vmatprep.subr.bf16.mxu0 0
        %1270 = vmatpush2.bf16.xpose.msra.mxu0 0
        %1271 = vmatprep.subr.bf16.mxu0 0
        %1272 = vmatpush2.bf16.xpose.msra.mxu0 0
        %1273 = vmatprep.subr.bf16.mxu0 0
        %1274 = vmatpush2.bf16.xpose.msra.mxu0 0
        %1275 = vmatprep.subr.bf16.mxu0 0
        %1276 = vmatpush2.bf16.xpose.msra.mxu0 0
        %1277 = vmatprep.subr.bf16.mxu0 0
        %1278 = vmatpush2.bf16.xpose.msra.mxu0 0
        %1279 = vmatprep.subr.bf16.mxu0 0
        %1280 = vmatpush2.bf16.xpose.msra.mxu0 0
        %1281 = vmatprep.mubr.bf16.mxu0 0
        %1282 = vmatmul.mubr.bf16.gmra.mxu0 %v1244
        %v1283 = vpop.f32.mrf.mxu0
        %v1284 = vadd.f32 0.0, %v1283
        %v1285 = vpop.f32.mrf.mxu0
        %v1286 = vpop.f32.mrf.mxu0
        %v1287 = vadd.f32 0.0, %v1286
        %v1288 = vpop.f32.mrf.mxu0
        %1289 = vdwg.mxu0
        %v1291 = vsel %vm897, %v1132, 0
        %v1294 = vsel %vm897, %v1240, 0
        %1296 = vmatprep.subr.bf16.mxu0 0
        %1297 = vmatpush1.bf16.xpose.msra.mxu0 0
        %1298 = vmatprep.subr.bf16.mxu0 0
        %1299 = vmatpush1.bf16.xpose.msra.mxu0 0
        %1300 = vmatprep.subr.bf16.mxu0 0
        %1301 = vmatpush1.bf16.xpose.msra.mxu0 0
        %1302 = vmatprep.subr.bf16.mxu0 0
        %1303 = vmatpush1.bf16.xpose.msra.mxu0 0
        %1304 = vmatprep.subr.bf16.mxu0 0
        %1305 = vmatpush1.bf16.xpose.msra.mxu0 0
        %1306 = vmatprep.subr.bf16.mxu0 0
        %1307 = vmatpush1.bf16.xpose.msra.mxu0 0
        %1308 = vmatprep.subr.bf16.mxu0 0
        %1309 = vmatpush1.bf16.xpose.msra.mxu0 0
        %1310 = vmatprep.subr.bf16.mxu0 0
        %1311 = vmatpush1.bf16.xpose.msra.mxu0 %v1294
        %1312 = vmatprep.subr.bf16.mxu0 0
        %1313 = vmatpush2.bf16.xpose.msra.mxu0 0
        %1314 = vmatprep.subr.bf16.mxu0 0
        %1315 = vmatpush2.bf16.xpose.msra.mxu0 0
        %1316 = vmatprep.subr.bf16.mxu0 0
        %1317 = vmatpush2.bf16.xpose.msra.mxu0 0
        %1318 = vmatprep.subr.bf16.mxu0 0
        %1319 = vmatpush2.bf16.xpose.msra.mxu0 0
        %1320 = vmatprep.subr.bf16.mxu0 0
        %1321 = vmatpush2.bf16.xpose.msra.mxu0 0
        %1322 = vmatprep.subr.bf16.mxu0 0
        %1323 = vmatpush2.bf16.xpose.msra.mxu0 0
        %1324 = vmatprep.subr.bf16.mxu0 0
        %1325 = vmatpush2.bf16.xpose.msra.mxu0 0
        %1326 = vmatprep.subr.bf16.mxu0 0
        %1327 = vmatpush2.bf16.xpose.msra.mxu0 0
        %1328 = vmatprep.mubr.bf16.mxu0 0
        %1329 = vmatmul.mubr.bf16.gmra.mxu0 %v1291
        %v1330 = vpop.f32.mrf.mxu0
        %v1331 = vadd.f32 0.0, %v1330
        %v1332 = vpop.f32.mrf.mxu0
        %v1333 = vpop.f32.mrf.mxu0
        %v1334 = vadd.f32 0.0, %v1333
        %v1335 = vpop.f32.mrf.mxu0
        %1336 = vdwg.mxu0
        %v1338 = vsel %vm897, %v1133, 0
        %v1341 = vsel %vm897, %v1241, 0
        %1343 = vmatprep.subr.bf16.mxu0 0
        %1344 = vmatpush1.bf16.xpose.msra.mxu0 0
        %1345 = vmatprep.subr.bf16.mxu0 0
        %1346 = vmatpush1.bf16.xpose.msra.mxu0 0
        %1347 = vmatprep.subr.bf16.mxu0 0
        %1348 = vmatpush1.bf16.xpose.msra.mxu0 0
        %1349 = vmatprep.subr.bf16.mxu0 0
        %1350 = vmatpush1.bf16.xpose.msra.mxu0 0
        %1351 = vmatprep.subr.bf16.mxu0 0
        %1352 = vmatpush1.bf16.xpose.msra.mxu0 0
        %1353 = vmatprep.subr.bf16.mxu0 0
        %1354 = vmatpush1.bf16.xpose.msra.mxu0 0
        %1355 = vmatprep.subr.bf16.mxu0 0
        %1356 = vmatpush1.bf16.xpose.msra.mxu0 0
        %1357 = vmatprep.subr.bf16.mxu0 0
        %1358 = vmatpush1.bf16.xpose.msra.mxu0 %v1341
        %1359 = vmatprep.subr.bf16.mxu0 0
        %1360 = vmatpush2.bf16.xpose.msra.mxu0 0
        %1361 = vmatprep.subr.bf16.mxu0 0
        %1362 = vmatpush2.bf16.xpose.msra.mxu0 0
        %1363 = vmatprep.subr.bf16.mxu0 0
        %1364 = vmatpush2.bf16.xpose.msra.mxu0 0
        %1365 = vmatprep.subr.bf16.mxu0 0
        %1366 = vmatpush2.bf16.xpose.msra.mxu0 0
        %1367 = vmatprep.subr.bf16.mxu0 0
        %1368 = vmatpush2.bf16.xpose.msra.mxu0 0
        %1369 = vmatprep.subr.bf16.mxu0 0
        %1370 = vmatpush2.bf16.xpose.msra.mxu0 0
        %1371 = vmatprep.subr.bf16.mxu0 0
        %1372 = vmatpush2.bf16.xpose.msra.mxu0 0
        %1373 = vmatprep.subr.bf16.mxu0 0
        %1374 = vmatpush2.bf16.xpose.msra.mxu0 0
        %1375 = vmatprep.mubr.bf16.mxu0 0
        %1376 = vmatmul.mubr.bf16.gmra.mxu0 %v1338
        %v1377 = vpop.f32.mrf.mxu0
        %v1378 = vadd.f32 0.0, %v1377
        %v1379 = vpop.f32.mrf.mxu0
        %v1380 = vpop.f32.mrf.mxu0
        %v1381 = vadd.f32 0.0, %v1380
        %v1382 = vpop.f32.mrf.mxu0
        %1383 = vdwg.mxu0
        %v1385 = vsel %vm897, %v1134, 0
        %v1388 = vsel %vm897, %v1242, 0
        %1390 = vmatprep.subr.bf16.mxu0 0
        %1391 = vmatpush1.bf16.xpose.msra.mxu0 0
        %1392 = vmatprep.subr.bf16.mxu0 0
        %1393 = vmatpush1.bf16.xpose.msra.mxu0 0
        %1394 = vmatprep.subr.bf16.mxu0 0
        %1395 = vmatpush1.bf16.xpose.msra.mxu0 0
        %1396 = vmatprep.subr.bf16.mxu0 0
        %1397 = vmatpush1.bf16.xpose.msra.mxu0 0
        %1398 = vmatprep.subr.bf16.mxu0 0
        %1399 = vmatpush1.bf16.xpose.msra.mxu0 0
        %1400 = vmatprep.subr.bf16.mxu0 0
        %1401 = vmatpush1.bf16.xpose.msra.mxu0 0
        %1402 = vmatprep.subr.bf16.mxu0 0
        %1403 = vmatpush1.bf16.xpose.msra.mxu0 0
        %1404 = vmatprep.subr.bf16.mxu0 0
        %1405 = vmatpush1.bf16.xpose.msra.mxu0 %v1388
        %1406 = vmatprep.subr.bf16.mxu0 0
        %1407 = vmatpush2.bf16.xpose.msra.mxu0 0
        %1408 = vmatprep.subr.bf16.mxu0 0
        %1409 = vmatpush2.bf16.xpose.msra.mxu0 0
        %1410 = vmatprep.subr.bf16.mxu0 0
        %1411 = vmatpush2.bf16.xpose.msra.mxu0 0
        %1412 = vmatprep.subr.bf16.mxu0 0
        %1413 = vmatpush2.bf16.xpose.msra.mxu0 0
        %1414 = vmatprep.subr.bf16.mxu0 0
        %1415 = vmatpush2.bf16.xpose.msra.mxu0 0
        %1416 = vmatprep.subr.bf16.mxu0 0
        %1417 = vmatpush2.bf16.xpose.msra.mxu0 0
        %1418 = vmatprep.subr.bf16.mxu0 0
        %1419 = vmatpush2.bf16.xpose.msra.mxu0 0
        %1420 = vmatprep.subr.bf16.mxu0 0
        %1421 = vmatpush2.bf16.xpose.msra.mxu0 0
        %1422 = vmatprep.mubr.bf16.mxu0 0
        %1423 = vmatmul.mubr.bf16.gmra.mxu0 %v1385
        %v1424 = vpop.f32.mrf.mxu0
        %v1425 = vadd.f32 0.0, %v1424
        %v1426 = vpop.f32.mrf.mxu0
        %v1427 = vpop.f32.mrf.mxu0
        %v1428 = vadd.f32 0.0, %v1427
        %v1429 = vpop.f32.mrf.mxu0
        %1430 = vdwg.mxu0
        %vm1431 = vcmask 130048
        %v1432 = vsel %vm1431, %v1284, -inf
        %1433 = vmax.xlane.f32.xlu0 %v1432
        %v1434 = vpop.xlane.xlu0 %1433
        %v1435 = vsel %vm1431, %v1287, -inf
        %1436 = vmax.xlane.f32.xlu0 %v1435
        %v1437 = vpop.xlane.xlu0 %1436
        %v1438 = vsel %vm1431, %v1331, -inf
        %1439 = vmax.xlane.f32.xlu0 %v1438
        %v1440 = vpop.xlane.xlu0 %1439
        %v1441 = vsel %vm1431, %v1334, -inf
        %1442 = vmax.xlane.f32.xlu0 %v1441
        %v1443 = vpop.xlane.xlu0 %1442
        %v1444 = vsel %vm1431, %v1378, -inf
        %1445 = vmax.xlane.f32.xlu0 %v1444
        %v1446 = vpop.xlane.xlu0 %1445
        %v1447 = vsel %vm1431, %v1381, -inf
        %1448 = vmax.xlane.f32.xlu0 %v1447
        %v1449 = vpop.xlane.xlu0 %1448
        %v1450 = vsel %vm1431, %v1425, -inf
        %1451 = vmax.xlane.f32.xlu0 %v1450
        %v1452 = vpop.xlane.xlu0 %1451
        %v1453 = vsel %vm1431, %v1428, -inf
        %1454 = vmax.xlane.f32.xlu0 %v1453
        %v1455 = vpop.xlane.xlu0 %1454
        %v1456 = vsub.f32 %v1284, %v1434
        %v1457 = vsub.f32 %v1287, %v1437
        %v1458 = vsub.f32 %v1331, %v1440
        %v1459 = vsub.f32 %v1334, %v1443
        %v1460 = vsub.f32 %v1378, %v1446
        %v1461 = vsub.f32 %v1381, %v1449
        %v1462 = vsub.f32 %v1425, %v1452
        %v1463 = vsub.f32 %v1428, %v1455
        %v1464 = vmul.f32 %v1456, 1.442695
        %v1465 = vpow.pop %v1464
        %v1466 = vmul.f32 %v1457, 1.442695
        %v1467 = vpow.pop %v1466
        %v1468 = vmul.f32 %v1458, 1.442695
        %v1469 = vpow.pop %v1468
        %v1470 = vmul.f32 %v1459, 1.442695
        %v1471 = vpow.pop %v1470
        %v1472 = vmul.f32 %v1460, 1.442695
        %v1473 = vpow.pop %v1472
        %v1474 = vmul.f32 %v1461, 1.442695
        %v1475 = vpow.pop %v1474
        %v1476 = vmul.f32 %v1462, 1.442695
        %v1477 = vpow.pop %v1476
        %v1478 = vmul.f32 %v1463, 1.442695
        %v1479 = vpow.pop %v1478
        %v1480 = vsel %vm1431, %v1465, 0.0
        %1481 = vadd.xlane.f32.xlu0 %v1480
        %v1482 = vpop.xlane.xlu0 %1481
        %v1483 = vsel %vm1431, %v1467, 0.0
        %1484 = vadd.xlane.f32.xlu0 %v1483
        %v1485 = vpop.xlane.xlu0 %1484
        %v1486 = vsel %vm1431, %v1469, 0.0
        %1487 = vadd.xlane.f32.xlu0 %v1486
        %v1488 = vpop.xlane.xlu0 %1487
        %v1489 = vsel %vm1431, %v1471, 0.0
        %1490 = vadd.xlane.f32.xlu0 %v1489
        %v1491 = vpop.xlane.xlu0 %1490
        %v1492 = vsel %vm1431, %v1473, 0.0
        %1493 = vadd.xlane.f32.xlu0 %v1492
        %v1494 = vpop.xlane.xlu0 %1493
        %v1495 = vsel %vm1431, %v1475, 0.0
        %1496 = vadd.xlane.f32.xlu0 %v1495
        %v1497 = vpop.xlane.xlu0 %1496
        %v1498 = vsel %vm1431, %v1477, 0.0
        %1499 = vadd.xlane.f32.xlu0 %v1498
        %v1500 = vpop.xlane.xlu0 %1499
        %v1501 = vsel %vm1431, %v1479, 0.0
        %1502 = vadd.xlane.f32.xlu0 %v1501
        %v1503 = vpop.xlane.xlu0 %1502
        %v1504 = vpack.c.bf16 %v1467, %v1465
        %v1505 = vpack.c.bf16 %v1471, %v1469
        %v1506 = vpack.c.bf16 %v1475, %v1473
        %v1507 = vpack.c.bf16 %v1479, %v1477
        %v1508 = vld [vmem:[#allocation4] sm:$0xf]
        %v1509 = vld [vmem:[#allocation4 + $0x4] sm:$0xf]
        %v1510 = vld [vmem:[#allocation4 + $0x8] sm:$0xf]
        %v1511 = vld [vmem:[#allocation4 + $0xc] sm:$0xf]
        %v1512 = vld [vmem:[#allocation4 + $0x10] sm:$0xf]
        %v1513 = vld [vmem:[#allocation4 + $0x14] sm:$0xf]
        %v1514 = vld [vmem:[#allocation4 + $0x18] sm:$0xf]
        %v1515 = vld [vmem:[#allocation4 + $0x1c] sm:$0xf]
        %v1518 = vunpack.c.l.b16 %v1508
        %v1519 = vunpack.c.l.b16 %v1509
        %v1520 = vpack.c.b16 %v1519, %v1518
        %v1523 = vsel %vm1431, %v1504, 0
        %1525 = vmatprep.subr.bf16.mxu0 0
        %1526 = vmatpush1.bf16.msra.mxu0 0
        %1527 = vmatprep.subr.bf16.mxu0 0
        %1528 = vmatpush1.bf16.msra.mxu0 0
        %1529 = vmatprep.subr.bf16.mxu0 0
        %1530 = vmatpush1.bf16.msra.mxu0 0
        %1531 = vmatprep.subr.bf16.mxu0 0
        %1532 = vmatpush1.bf16.msra.mxu0 0
        %1533 = vmatprep.subr.bf16.mxu0 0
        %1534 = vmatpush1.bf16.msra.mxu0 0
        %1535 = vmatprep.subr.bf16.mxu0 0
        %1536 = vmatpush1.bf16.msra.mxu0 0
        %1537 = vmatprep.subr.bf16.mxu0 0
        %1538 = vmatpush1.bf16.msra.mxu0 0
        %1539 = vmatprep.subr.bf16.mxu0 0
        %1540 = vmatpush1.bf16.msra.mxu0 %v1520
        %1541 = vmatprep.subr.bf16.mxu0 0
        %1542 = vmatpush2.bf16.msra.mxu0 0
        %1543 = vmatprep.subr.bf16.mxu0 0
        %1544 = vmatpush2.bf16.msra.mxu0 0
        %1545 = vmatprep.subr.bf16.mxu0 0
        %1546 = vmatpush2.bf16.msra.mxu0 0
        %1547 = vmatprep.subr.bf16.mxu0 0
        %1548 = vmatpush2.bf16.msra.mxu0 0
        %1549 = vmatprep.subr.bf16.mxu0 0
        %1550 = vmatpush2.bf16.msra.mxu0 0
        %1551 = vmatprep.subr.bf16.mxu0 0
        %1552 = vmatpush2.bf16.msra.mxu0 0
        %1553 = vmatprep.subr.bf16.mxu0 0
        %1554 = vmatpush2.bf16.msra.mxu0 0
        %1555 = vmatprep.subr.bf16.mxu0 0
        %1556 = vmatpush2.bf16.msra.mxu0 0
        %1557 = vmatprep.mubr.bf16.mxu0 0
        %1558 = vmatmul.mubr.bf16.gmra.mxu0 %v1523
        %v1559 = vpop.f32.mrf.mxu0
        %v1560 = vadd.f32 0.0, %v1559
        %v1561 = vpop.f32.mrf.mxu0
        %v1562 = vpop.f32.mrf.mxu0
        %v1563 = vadd.f32 0.0, %v1562
        %v1564 = vpop.f32.mrf.mxu0
        %1565 = vdwg.mxu0
        %v1568 = vunpack.c.l.b16 %v1510
        %v1569 = vunpack.c.l.b16 %v1511
        %v1570 = vpack.c.b16 %v1569, %v1568
        %v1573 = vsel %vm1431, %v1505, 0
        %1575 = vmatprep.subr.bf16.mxu0 0
        %1576 = vmatpush1.bf16.msra.mxu0 0
        %1577 = vmatprep.subr.bf16.mxu0 0
        %1578 = vmatpush1.bf16.msra.mxu0 0
        %1579 = vmatprep.subr.bf16.mxu0 0
        %1580 = vmatpush1.bf16.msra.mxu0 0
        %1581 = vmatprep.subr.bf16.mxu0 0
        %1582 = vmatpush1.bf16.msra.mxu0 0
        %1583 = vmatprep.subr.bf16.mxu0 0
        %1584 = vmatpush1.bf16.msra.mxu0 0
        %1585 = vmatprep.subr.bf16.mxu0 0
        %1586 = vmatpush1.bf16.msra.mxu0 0
        %1587 = vmatprep.subr.bf16.mxu0 0
        %1588 = vmatpush1.bf16.msra.mxu0 0
        %1589 = vmatprep.subr.bf16.mxu0 0
        %1590 = vmatpush1.bf16.msra.mxu0 %v1570
        %1591 = vmatprep.subr.bf16.mxu0 0
        %1592 = vmatpush2.bf16.msra.mxu0 0
        %1593 = vmatprep.subr.bf16.mxu0 0
        %1594 = vmatpush2.bf16.msra.mxu0 0
        %1595 = vmatprep.subr.bf16.mxu0 0
        %1596 = vmatpush2.bf16.msra.mxu0 0
        %1597 = vmatprep.subr.bf16.mxu0 0
        %1598 = vmatpush2.bf16.msra.mxu0 0
        %1599 = vmatprep.subr.bf16.mxu0 0
        %1600 = vmatpush2.bf16.msra.mxu0 0
        %1601 = vmatprep.subr.bf16.mxu0 0
        %1602 = vmatpush2.bf16.msra.mxu0 0
        %1603 = vmatprep.subr.bf16.mxu0 0
        %1604 = vmatpush2.bf16.msra.mxu0 0
        %1605 = vmatprep.subr.bf16.mxu0 0
        %1606 = vmatpush2.bf16.msra.mxu0 0
        %1607 = vmatprep.mubr.bf16.mxu0 0
        %1608 = vmatmul.mubr.bf16.gmra.mxu0 %v1573
        %v1609 = vpop.f32.mrf.mxu0
        %v1610 = vadd.f32 0.0, %v1609
        %v1611 = vpop.f32.mrf.mxu0
        %v1612 = vpop.f32.mrf.mxu0
        %v1613 = vadd.f32 0.0, %v1612
        %v1614 = vpop.f32.mrf.mxu0
        %1615 = vdwg.mxu0
        %v1618 = vunpack.c.l.b16 %v1512
        %v1619 = vunpack.c.l.b16 %v1513
        %v1620 = vpack.c.b16 %v1619, %v1618
        %v1623 = vsel %vm1431, %v1506, 0
        %1625 = vmatprep.subr.bf16.mxu0 0
        %1626 = vmatpush1.bf16.msra.mxu0 0
        %1627 = vmatprep.subr.bf16.mxu0 0
        %1628 = vmatpush1.bf16.msra.mxu0 0
        %1629 = vmatprep.subr.bf16.mxu0 0
        %1630 = vmatpush1.bf16.msra.mxu0 0
        %1631 = vmatprep.subr.bf16.mxu0 0
        %1632 = vmatpush1.bf16.msra.mxu0 0
        %1633 = vmatprep.subr.bf16.mxu0 0
        %1634 = vmatpush1.bf16.msra.mxu0 0
        %1635 = vmatprep.subr.bf16.mxu0 0
        %1636 = vmatpush1.bf16.msra.mxu0 0
        %1637 = vmatprep.subr.bf16.mxu0 0
        %1638 = vmatpush1.bf16.msra.mxu0 0
        %1639 = vmatprep.subr.bf16.mxu0 0
        %1640 = vmatpush1.bf16.msra.mxu0 %v1620
        %1641 = vmatprep.subr.bf16.mxu0 0
        %1642 = vmatpush2.bf16.msra.mxu0 0
        %1643 = vmatprep.subr.bf16.mxu0 0
        %1644 = vmatpush2.bf16.msra.mxu0 0
        %1645 = vmatprep.subr.bf16.mxu0 0
        %1646 = vmatpush2.bf16.msra.mxu0 0
        %1647 = vmatprep.subr.bf16.mxu0 0
        %1648 = vmatpush2.bf16.msra.mxu0 0
        %1649 = vmatprep.subr.bf16.mxu0 0
        %1650 = vmatpush2.bf16.msra.mxu0 0
        %1651 = vmatprep.subr.bf16.mxu0 0
        %1652 = vmatpush2.bf16.msra.mxu0 0
        %1653 = vmatprep.subr.bf16.mxu0 0
        %1654 = vmatpush2.bf16.msra.mxu0 0
        %1655 = vmatprep.subr.bf16.mxu0 0
        %1656 = vmatpush2.bf16.msra.mxu0 0
        %1657 = vmatprep.mubr.bf16.mxu0 0
        %1658 = vmatmul.mubr.bf16.gmra.mxu0 %v1623
        %v1659 = vpop.f32.mrf.mxu0
        %v1660 = vadd.f32 0.0, %v1659
        %v1661 = vpop.f32.mrf.mxu0
        %v1662 = vpop.f32.mrf.mxu0
        %v1663 = vadd.f32 0.0, %v1662
        %v1664 = vpop.f32.mrf.mxu0
        %1665 = vdwg.mxu0
        %v1668 = vunpack.c.l.b16 %v1514
        %v1669 = vunpack.c.l.b16 %v1515
        %v1670 = vpack.c.b16 %v1669, %v1668
        %v1673 = vsel %vm1431, %v1507, 0
        %1675 = vmatprep.subr.bf16.mxu0 0
        %1676 = vmatpush1.bf16.msra.mxu0 0
        %1677 = vmatprep.subr.bf16.mxu0 0
        %1678 = vmatpush1.bf16.msra.mxu0 0
        %1679 = vmatprep.subr.bf16.mxu0 0
        %1680 = vmatpush1.bf16.msra.mxu0 0
        %1681 = vmatprep.subr.bf16.mxu0 0
        %1682 = vmatpush1.bf16.msra.mxu0 0
        %1683 = vmatprep.subr.bf16.mxu0 0
        %1684 = vmatpush1.bf16.msra.mxu0 0
        %1685 = vmatprep.subr.bf16.mxu0 0
        %1686 = vmatpush1.bf16.msra.mxu0 0
        %1687 = vmatprep.subr.bf16.mxu0 0
        %1688 = vmatpush1.bf16.msra.mxu0 0
        %1689 = vmatprep.subr.bf16.mxu0 0
        %1690 = vmatpush1.bf16.msra.mxu0 %v1670
        %1691 = vmatprep.subr.bf16.mxu0 0
        %1692 = vmatpush2.bf16.msra.mxu0 0
        %1693 = vmatprep.subr.bf16.mxu0 0
        %1694 = vmatpush2.bf16.msra.mxu0 0
        %1695 = vmatprep.subr.bf16.mxu0 0
        %1696 = vmatpush2.bf16.msra.mxu0 0
        %1697 = vmatprep.subr.bf16.mxu0 0
        %1698 = vmatpush2.bf16.msra.mxu0 0
        %1699 = vmatprep.subr.bf16.mxu0 0
        %1700 = vmatpush2.bf16.msra.mxu0 0
        %1701 = vmatprep.subr.bf16.mxu0 0
        %1702 = vmatpush2.bf16.msra.mxu0 0
        %1703 = vmatprep.subr.bf16.mxu0 0
        %1704 = vmatpush2.bf16.msra.mxu0 0
        %1705 = vmatprep.subr.bf16.mxu0 0
        %1706 = vmatpush2.bf16.msra.mxu0 0
        %1707 = vmatprep.mubr.bf16.mxu0 0
        %1708 = vmatmul.mubr.bf16.gmra.mxu0 %v1673
        %v1709 = vpop.f32.mrf.mxu0
        %v1710 = vadd.f32 0.0, %v1709
        %v1711 = vpop.f32.mrf.mxu0
        %v1712 = vpop.f32.mrf.mxu0
        %v1713 = vadd.f32 0.0, %v1712
        %v1714 = vpop.f32.mrf.mxu0
        %1715 = vdwg.mxu0
        %v1716 = vrcp.pop %v1482
        %v1717 = vmul.f32 %v1560, %v1716
        %v1718 = vrcp.pop %v1485
        %v1719 = vmul.f32 %v1563, %v1718
        %v1720 = vrcp.pop %v1488
        %v1721 = vmul.f32 %v1610, %v1720
        %v1722 = vrcp.pop %v1491
        %v1723 = vmul.f32 %v1613, %v1722
        %v1724 = vrcp.pop %v1494
        %v1725 = vmul.f32 %v1660, %v1724
        %v1726 = vrcp.pop %v1497
        %v1727 = vmul.f32 %v1663, %v1726
        %v1728 = vrcp.pop %v1500
        %v1729 = vmul.f32 %v1710, %v1728
        %v1730 = vrcp.pop %v1503
        %v1731 = vmul.f32 %v1713, %v1730
        %v1732 = vpack.c.bf16 %v1719, %v1717
        %v1734 = vunpack.c.l.b16 %v1732
        %v1735 = vunpack.c.h.b16 %v1732
        %v1736 = vpack.c.b16 %v1734, %v1734
        %v1737 = vpack.c.b16 %v1735, %v1735
        %1740 = vst.msk [vmem:[#allocation5] sm:$0xf] %vm910, %v1736
        %1741 = vst.msk [vmem:[#allocation5 + $0x4] sm:$0xf] %vm910, %v1737
        %v1742 = vpack.c.bf16 %v1723, %v1721
        %v1744 = vunpack.c.l.b16 %v1742
        %v1745 = vunpack.c.h.b16 %v1742
        %v1746 = vpack.c.b16 %v1744, %v1744
        %v1747 = vpack.c.b16 %v1745, %v1745
        %1748 = vrot.lane.b32.xlu0 %v1746, 32
        %v1749 = vpop.permute.xlu0 %1748
        %1750 = vrot.lane.b32.xlu0 %v1747, 32
        %v1751 = vpop.permute.xlu0 %1750
        %vm1754 = vcmask 519424
        %1755 = vst.msk [vmem:[#allocation5] sm:$0xf] %vm1754, %v1749
        %1756 = vst.msk [vmem:[#allocation5 + $0x4] sm:$0xf] %vm1754, %v1751
        %v1757 = vpack.c.bf16 %v1727, %v1725
        %v1759 = vunpack.c.l.b16 %v1757
        %v1760 = vunpack.c.h.b16 %v1757
        %v1761 = vpack.c.b16 %v1759, %v1759
        %v1762 = vpack.c.b16 %v1760, %v1760
        %1763 = vrot.lane.b32.xlu0 %v1761, 64
        %v1764 = vpop.permute.xlu0 %1763
        %1765 = vrot.lane.b32.xlu0 %v1762, 64
        %v1766 = vpop.permute.xlu0 %1765
        %vm1769 = vcmask 781824
        %1770 = vst.msk [vmem:[#allocation5] sm:$0xf] %vm1769, %v1764
        %1771 = vst.msk [vmem:[#allocation5 + $0x4] sm:$0xf] %vm1769, %v1766
        %v1772 = vpack.c.bf16 %v1731, %v1729
        %v1774 = vunpack.c.l.b16 %v1772
        %v1775 = vunpack.c.h.b16 %v1772
        %v1776 = vpack.c.b16 %v1774, %v1774
        %v1777 = vpack.c.b16 %v1775, %v1775
        %1778 = vrot.lane.b32.xlu0 %v1776, 96
        %v1779 = vpop.permute.xlu0 %1778
        %1780 = vrot.lane.b32.xlu0 %v1777, 96
        %v1781 = vpop.permute.xlu0 %1780
        %vm1784 = vcmask 1044224
        %1785 = vst.msk [vmem:[#allocation5] sm:$0xf] %vm1784, %v1779
        %1786 = vst.msk [vmem:[#allocation5 + $0x4] sm:$0xf] %vm1784, %v1781
        %v1787 = vld [vmem:[#allocation5] sm:$0xf]
        %v1788 = vld [vmem:[#allocation5 + $0x4] sm:$0xf]
        %v1789 = vld [vmem:[#allocation14] sm:$0xf]
        %v1790 = vld [vmem:[#allocation14 + $0x4] sm:$0xf]
        %v1791 = vld [vmem:[#allocation14 + $0x8] sm:$0xf]
        %v1792 = vld [vmem:[#allocation14 + $0xc] sm:$0xf]
        %v1793 = vld [vmem:[#allocation14 + $0x10] sm:$0xf]
        %v1794 = vld [vmem:[#allocation14 + $0x14] sm:$0xf]
        %v1795 = vld [vmem:[#allocation14 + $0x18] sm:$0xf]
        %v1796 = vld [vmem:[#allocation14 + $0x1c] sm:$0xf]
        %v1797 = vld [vmem:[#allocation14 + $0x20] sm:$0xf]
        %v1798 = vld [vmem:[#allocation14 + $0x24] sm:$0xf]
        %v1799 = vld [vmem:[#allocation14 + $0x28] sm:$0xf]
        %v1800 = vld [vmem:[#allocation14 + $0x2c] sm:$0xf]
        %v1801 = vld [vmem:[#allocation14 + $0x30] sm:$0xf]
        %v1802 = vld [vmem:[#allocation14 + $0x34] sm:$0xf]
        %v1803 = vld [vmem:[#allocation14 + $0x38] sm:$0xf]
        %v1804 = vld [vmem:[#allocation14 + $0x3c] sm:$0xf]
        %v1807 = vunpack.c.l.b16 %v1787
        %v1808 = vunpack.c.l.b16 %v1788
        %v1809 = vpack.c.b16 %v1808, %v1807
        %v1827 = vunpack.c.l.b16 %v1789
        %v1828 = vunpack.c.l.b16 %v1790
        %v1829 = vunpack.c.l.b16 %v1791
        %v1830 = vunpack.c.l.b16 %v1792
        %v1831 = vunpack.c.l.b16 %v1793
        %v1832 = vunpack.c.l.b16 %v1794
        %v1833 = vunpack.c.l.b16 %v1795
        %v1834 = vunpack.c.l.b16 %v1796
        %v1835 = vunpack.c.l.b16 %v1797
        %v1836 = vunpack.c.l.b16 %v1798
        %v1837 = vunpack.c.l.b16 %v1799
        %v1838 = vunpack.c.l.b16 %v1800
        %v1839 = vunpack.c.l.b16 %v1801
        %v1840 = vunpack.c.l.b16 %v1802
        %v1841 = vunpack.c.l.b16 %v1803
        %v1842 = vunpack.c.l.b16 %v1804
        %v1843 = vpack.c.b16 %v1828, %v1827
        %v1844 = vpack.c.b16 %v1830, %v1829
        %v1845 = vpack.c.b16 %v1832, %v1831
        %v1846 = vpack.c.b16 %v1834, %v1833
        %v1847 = vpack.c.b16 %v1836, %v1835
        %v1848 = vpack.c.b16 %v1838, %v1837
        %v1849 = vpack.c.b16 %v1840, %v1839
        %v1850 = vpack.c.b16 %v1842, %v1841
        %1859 = vmatprep.subr.bf16.mxu0 0
        %1860 = vmatpush1.bf16.msra.mxu0 %v1850
        %1861 = vmatprep.subr.bf16.mxu0 0
        %1862 = vmatpush1.bf16.msra.mxu0 %v1849
        %1863 = vmatprep.subr.bf16.mxu0 0
        %1864 = vmatpush1.bf16.msra.mxu0 %v1848
        %1865 = vmatprep.subr.bf16.mxu0 0
        %1866 = vmatpush1.bf16.msra.mxu0 %v1847
        %1867 = vmatprep.subr.bf16.mxu0 0
        %1868 = vmatpush1.bf16.msra.mxu0 %v1846
        %1869 = vmatprep.subr.bf16.mxu0 0
        %1870 = vmatpush1.bf16.msra.mxu0 %v1845
        %1871 = vmatprep.subr.bf16.mxu0 0
        %1872 = vmatpush1.bf16.msra.mxu0 %v1844
        %1873 = vmatprep.subr.bf16.mxu0 0
        %1874 = vmatpush1.bf16.msra.mxu0 %v1843
        %1875 = vmatprep.subr.bf16.mxu0 0
        %1876 = vmatpush2.bf16.msra.mxu0 0
        %1877 = vmatprep.subr.bf16.mxu0 0
        %1878 = vmatpush2.bf16.msra.mxu0 0
        %1879 = vmatprep.subr.bf16.mxu0 0
        %1880 = vmatpush2.bf16.msra.mxu0 0
        %1881 = vmatprep.subr.bf16.mxu0 0
        %1882 = vmatpush2.bf16.msra.mxu0 0
        %1883 = vmatprep.subr.bf16.mxu0 0
        %1884 = vmatpush2.bf16.msra.mxu0 0
        %1885 = vmatprep.subr.bf16.mxu0 0
        %1886 = vmatpush2.bf16.msra.mxu0 0
        %1887 = vmatprep.subr.bf16.mxu0 0
        %1888 = vmatpush2.bf16.msra.mxu0 0
        %1889 = vmatprep.subr.bf16.mxu0 0
        %1890 = vmatpush2.bf16.msra.mxu0 0
        %1891 = vmatprep.mubr.bf16.mxu0 0
        %1892 = vmatmul.mubr.bf16.gmra.mxu0 %v1809
        %v1893 = vpop.f32.mrf.mxu0
        %v1894 = vadd.f32 0.0, %v1893
        %v1895 = vpop.f32.mrf.mxu0
        %v1896 = vpop.f32.mrf.mxu0
        %v1897 = vadd.f32 0.0, %v1896
        %v1898 = vpop.f32.mrf.mxu0
        %1899 = vdwg.mxu0
        %v1900 = vadd.f32 %v547, %v1894
        %v1901 = vadd.f32 %v548, %v1897
        %v1902 = vld [vmem:[%s9] sm:$0x1]
        %v1903 = vld [vmem:[%s10] sm:$0x1]
        %1904 = vadd.xlane.f32.xlu0 %v1900
        %v1905 = vpop.xlane.xlu0 %1904
        %1906 = vadd.xlane.f32.xlu0 %v1901
        %v1907 = vpop.xlane.xlu0 %1906
        %v1908 = vmul.f32 %v1905, %v555
        %v1909 = vmul.f32 %v1907, %v555
        %v1910 = vsub.f32 %v1900, %v1908
        %v1911 = vsub.f32 %v1901, %v1909
        %v1912 = vmul.f32 %v1910, %v1910
        %v1913 = vmul.f32 %v1911, %v1911
        %1914 = vadd.xlane.f32.xlu0 %v1912
        %v1915 = vpop.xlane.xlu0 %1914
        %1916 = vadd.xlane.f32.xlu0 %v1913
        %v1917 = vpop.xlane.xlu0 %1916
        %v1918 = vmul.f32 %v1915, %v555
        %v1919 = vmul.f32 %v1917, %v555
        %v1920 = vadd.f32 %v1918, 1e-05
        %v1921 = vadd.f32 %v1919, 1e-05
        %v1922 = vrsqrt.pop %v1920
        %v1923 = vrsqrt.pop %v1921
        %v1924 = vmul.f32 %v1910, %v1922
        %v1925 = vmul.f32 %v1911, %v1923
        %v1927 = vlaneseq
        %v1928 = vshrl.u32 %v1927, 7
        %v1929 = vsub.s32 0, %v1928
        %v1930 = vrot.slane %v1902, %v1929
        %v1932 = vmul.f32 %v1924, %v1930
        %v1933 = vmul.f32 %v1925, %v1930
        %v1935 = vlaneseq
        %v1936 = vshrl.u32 %v1935, 7
        %v1937 = vsub.s32 0, %v1936
        %v1938 = vrot.slane %v1903, %v1937
        %v1940 = vadd.f32 %v1932, %v1938
        %v1941 = vadd.f32 %v1933, %v1938
        %v1942 = vpack.c.bf16 %v1941, %v1940
        %v1943 = vld [vmem:[#allocation15] sm:$0xff]
        %v1944 = vld [vmem:[#allocation15 + $0x8] sm:$0xff]
        %v1945 = vld [vmem:[#allocation15 + $0x10] sm:$0xff]
        %v1946 = vld [vmem:[#allocation15 + $0x18] sm:$0xff]
        %v1947 = vld [vmem:[#allocation15 + $0x20] sm:$0xff]
        %v1948 = vld [vmem:[#allocation15 + $0x28] sm:$0xff]
        %v1949 = vld [vmem:[#allocation15 + $0x30] sm:$0xff]
        %v1950 = vld [vmem:[#allocation15 + $0x38] sm:$0xff]
        %v1951 = vld [vmem:[#allocation15 + $0x40] sm:$0xff]
        %v1952 = vld [vmem:[#allocation15 + $0x48] sm:$0xff]
        %v1953 = vld [vmem:[#allocation15 + $0x50] sm:$0xff]
        %v1954 = vld [vmem:[#allocation15 + $0x58] sm:$0xff]
        %v1955 = vld [vmem:[#allocation15 + $0x60] sm:$0xff]
        %v1956 = vld [vmem:[#allocation15 + $0x68] sm:$0xff]
        %v1957 = vld [vmem:[#allocation15 + $0x70] sm:$0xff]
        %v1958 = vld [vmem:[#allocation15 + $0x78] sm:$0xff]
        %v1959 = vld [vmem:[#allocation15 + $0x80] sm:$0xff]
        %v1960 = vld [vmem:[#allocation15 + $0x88] sm:$0xff]
        %v1961 = vld [vmem:[#allocation15 + $0x90] sm:$0xff]
        %v1962 = vld [vmem:[#allocation15 + $0x98] sm:$0xff]
        %v1963 = vld [vmem:[#allocation15 + $0xa0] sm:$0xff]
        %v1964 = vld [vmem:[#allocation15 + $0xa8] sm:$0xff]
        %v1965 = vld [vmem:[#allocation15 + $0xb0] sm:$0xff]
        %v1966 = vld [vmem:[#allocation15 + $0xb8] sm:$0xff]
        %v1967 = vld [vmem:[#allocation15 + $0xc0] sm:$0xff]
        %v1968 = vld [vmem:[#allocation15 + $0xc8] sm:$0xff]
        %v1969 = vld [vmem:[#allocation15 + $0xd0] sm:$0xff]
        %v1970 = vld [vmem:[#allocation15 + $0xd8] sm:$0xff]
        %v1971 = vld [vmem:[#allocation15 + $0xe0] sm:$0xff]
        %v1972 = vld [vmem:[#allocation15 + $0xe8] sm:$0xff]
        %v1973 = vld [vmem:[#allocation15 + $0xf0] sm:$0xff]
        %v1974 = vld [vmem:[#allocation15 + $0xf8] sm:$0xff]
        %v2007 = vunpack.c.l.b16 %v1943
        %v2008 = vunpack.c.h.b16 %v1943
        %v2009 = vunpack.c.l.b16 %v1944
        %v2010 = vunpack.c.h.b16 %v1944
        %v2011 = vunpack.c.l.b16 %v1945
        %v2012 = vunpack.c.h.b16 %v1945
        %v2013 = vunpack.c.l.b16 %v1946
        %v2014 = vunpack.c.h.b16 %v1946
        %v2015 = vunpack.c.l.b16 %v1947
        %v2016 = vunpack.c.h.b16 %v1947
        %v2017 = vunpack.c.l.b16 %v1948
        %v2018 = vunpack.c.h.b16 %v1948
        %v2019 = vunpack.c.l.b16 %v1949
        %v2020 = vunpack.c.h.b16 %v1949
        %v2021 = vunpack.c.l.b16 %v1950
        %v2022 = vunpack.c.h.b16 %v1950
        %v2023 = vunpack.c.l.b16 %v1951
        %v2024 = vunpack.c.h.b16 %v1951
        %v2025 = vunpack.c.l.b16 %v1952
        %v2026 = vunpack.c.h.b16 %v1952
        %v2027 = vunpack.c.l.b16 %v1953
        %v2028 = vunpack.c.h.b16 %v1953
        %v2029 = vunpack.c.l.b16 %v1954
        %v2030 = vunpack.c.h.b16 %v1954
        %v2031 = vunpack.c.l.b16 %v1955
        %v2032 = vunpack.c.h.b16 %v1955
        %v2033 = vunpack.c.l.b16 %v1956
        %v2034 = vunpack.c.h.b16 %v1956
        %v2035 = vunpack.c.l.b16 %v1957
        %v2036 = vunpack.c.h.b16 %v1957
        %v2037 = vunpack.c.l.b16 %v1958
        %v2038 = vunpack.c.h.b16 %v1958
        %v2039 = vunpack.c.l.b16 %v1959
        %v2040 = vunpack.c.h.b16 %v1959
        %v2041 = vunpack.c.l.b16 %v1960
        %v2042 = vunpack.c.h.b16 %v1960
        %v2043 = vunpack.c.l.b16 %v1961
        %v2044 = vunpack.c.h.b16 %v1961
        %v2045 = vunpack.c.l.b16 %v1962
        %v2046 = vunpack.c.h.b16 %v1962
        %v2047 = vunpack.c.l.b16 %v1963
        %v2048 = vunpack.c.h.b16 %v1963
        %v2049 = vunpack.c.l.b16 %v1964
        %v2050 = vunpack.c.h.b16 %v1964
        %v2051 = vunpack.c.l.b16 %v1965
        %v2052 = vunpack.c.h.b16 %v1965
        %v2053 = vunpack.c.l.b16 %v1966
        %v2054 = vunpack.c.h.b16 %v1966
        %v2055 = vunpack.c.l.b16 %v1967
        %v2056 = vunpack.c.h.b16 %v1967
        %v2057 = vunpack.c.l.b16 %v1968
        %v2058 = vunpack.c.h.b16 %v1968
        %v2059 = vunpack.c.l.b16 %v1969
        %v2060 = vunpack.c.h.b16 %v1969
        %v2061 = vunpack.c.l.b16 %v1970
        %v2062 = vunpack.c.h.b16 %v1970
        %v2063 = vunpack.c.l.b16 %v1971
        %v2064 = vunpack.c.h.b16 %v1971
        %v2065 = vunpack.c.l.b16 %v1972
        %v2066 = vunpack.c.h.b16 %v1972
        %v2067 = vunpack.c.l.b16 %v1973
        %v2068 = vunpack.c.h.b16 %v1973
        %v2069 = vunpack.c.l.b16 %v1974
        %v2070 = vunpack.c.h.b16 %v1974
        %v2071 = vpack.c.b16 %v2011, %v2007
        %v2072 = vpack.c.b16 %v2012, %v2008
        %v2073 = vpack.c.b16 %v2013, %v2009
        %v2074 = vpack.c.b16 %v2014, %v2010
        %v2075 = vpack.c.b16 %v2019, %v2015
        %v2076 = vpack.c.b16 %v2020, %v2016
        %v2077 = vpack.c.b16 %v2021, %v2017
        %v2078 = vpack.c.b16 %v2022, %v2018
        %v2079 = vpack.c.b16 %v2027, %v2023
        %v2080 = vpack.c.b16 %v2028, %v2024
        %v2081 = vpack.c.b16 %v2029, %v2025
        %v2082 = vpack.c.b16 %v2030, %v2026
        %v2083 = vpack.c.b16 %v2035, %v2031
        %v2084 = vpack.c.b16 %v2036, %v2032
        %v2085 = vpack.c.b16 %v2037, %v2033
        %v2086 = vpack.c.b16 %v2038, %v2034
        %v2087 = vpack.c.b16 %v2043, %v2039
        %v2088 = vpack.c.b16 %v2044, %v2040
        %v2089 = vpack.c.b16 %v2045, %v2041
        %v2090 = vpack.c.b16 %v2046, %v2042
        %v2091 = vpack.c.b16 %v2051, %v2047
        %v2092 = vpack.c.b16 %v2052, %v2048
        %v2093 = vpack.c.b16 %v2053, %v2049
        %v2094 = vpack.c.b16 %v2054, %v2050
        %v2095 = vpack.c.b16 %v2059, %v2055
        %v2096 = vpack.c.b16 %v2060, %v2056
        %v2097 = vpack.c.b16 %v2061, %v2057
        %v2098 = vpack.c.b16 %v2062, %v2058
        %v2099 = vpack.c.b16 %v2067, %v2063
        %v2100 = vpack.c.b16 %v2068, %v2064
        %v2101 = vpack.c.b16 %v2069, %v2065
        %v2102 = vpack.c.b16 %v2070, %v2066
        %2135 = vmatprep.subr.bf16.mxu0 %v2100
        %2136 = vmatpush1.bf16.msra.mxu0 %v2099
        %2137 = vmatprep.subr.bf16.mxu0 %v2096
        %2138 = vmatpush1.bf16.msra.mxu0 %v2095
        %2139 = vmatprep.subr.bf16.mxu0 %v2092
        %2140 = vmatpush1.bf16.msra.mxu0 %v2091
        %2141 = vmatprep.subr.bf16.mxu0 %v2088
        %2142 = vmatpush1.bf16.msra.mxu0 %v2087
        %2143 = vmatprep.subr.bf16.mxu0 %v2084
        %2144 = vmatpush1.bf16.msra.mxu0 %v2083
        %2145 = vmatprep.subr.bf16.mxu0 %v2080
        %2146 = vmatpush1.bf16.msra.mxu0 %v2079
        %2147 = vmatprep.subr.bf16.mxu0 %v2076
        %2148 = vmatpush1.bf16.msra.mxu0 %v2075
        %2149 = vmatprep.subr.bf16.mxu0 %v2072
        %2150 = vmatpush1.bf16.msra.mxu0 %v2071
        %2151 = vmatprep.subr.bf16.mxu0 0
        %2152 = vmatpush2.bf16.msra.mxu0 0
        %2153 = vmatprep.subr.bf16.mxu0 0
        %2154 = vmatpush2.bf16.msra.mxu0 0
        %2155 = vmatprep.subr.bf16.mxu0 0
        %2156 = vmatpush2.bf16.msra.mxu0 0
        %2157 = vmatprep.subr.bf16.mxu0 0
        %2158 = vmatpush2.bf16.msra.mxu0 0
        %2159 = vmatprep.subr.bf16.mxu0 0
        %2160 = vmatpush2.bf16.msra.mxu0 0
        %2161 = vmatprep.subr.bf16.mxu0 0
        %2162 = vmatpush2.bf16.msra.mxu0 0
        %2163 = vmatprep.subr.bf16.mxu0 0
        %2164 = vmatpush2.bf16.msra.mxu0 0
        %2165 = vmatprep.subr.bf16.mxu0 0
        %2166 = vmatpush2.bf16.msra.mxu0 0
        %2167 = vmatprep.mubr.bf16.mxu0 0
        %2168 = vmatmul.mubr.bf16.gmra.mxu0 %v1942
        %v2169 = vpop.f32.mrf.mxu0
        %v2170 = vadd.f32 0.0, %v2169
        %v2171 = vpop.f32.mrf.mxu0
        %v2172 = vadd.f32 0.0, %v2171
        %v2173 = vpop.f32.mrf.mxu0
        %v2174 = vadd.f32 0.0, %v2173
        %v2175 = vpop.f32.mrf.mxu0
        %v2176 = vadd.f32 0.0, %v2175
        %2177 = vdwg.mxu0
        %2178 = vmatprep.subr.bf16.mxu0 %v2102
        %2179 = vmatpush1.bf16.msra.mxu0 %v2101
        %2180 = vmatprep.subr.bf16.mxu0 %v2098
        %2181 = vmatpush1.bf16.msra.mxu0 %v2097
        %2182 = vmatprep.subr.bf16.mxu0 %v2094
        %2183 = vmatpush1.bf16.msra.mxu0 %v2093
        %2184 = vmatprep.subr.bf16.mxu0 %v2090
        %2185 = vmatpush1.bf16.msra.mxu0 %v2089
        %2186 = vmatprep.subr.bf16.mxu0 %v2086
        %2187 = vmatpush1.bf16.msra.mxu0 %v2085
        %2188 = vmatprep.subr.bf16.mxu0 %v2082
        %2189 = vmatpush1.bf16.msra.mxu0 %v2081
        %2190 = vmatprep.subr.bf16.mxu0 %v2078
        %2191 = vmatpush1.bf16.msra.mxu0 %v2077
        %2192 = vmatprep.subr.bf16.mxu0 %v2074
        %2193 = vmatpush1.bf16.msra.mxu0 %v2073
        %2194 = vmatprep.subr.bf16.mxu0 0
        %2195 = vmatpush2.bf16.msra.mxu0 0
        %2196 = vmatprep.subr.bf16.mxu0 0
        %2197 = vmatpush2.bf16.msra.mxu0 0
        %2198 = vmatprep.subr.bf16.mxu0 0
        %2199 = vmatpush2.bf16.msra.mxu0 0
        %2200 = vmatprep.subr.bf16.mxu0 0
        %2201 = vmatpush2.bf16.msra.mxu0 0
        %2202 = vmatprep.subr.bf16.mxu0 0
        %2203 = vmatpush2.bf16.msra.mxu0 0
        %2204 = vmatprep.subr.bf16.mxu0 0
        %2205 = vmatpush2.bf16.msra.mxu0 0
        %2206 = vmatprep.subr.bf16.mxu0 0
        %2207 = vmatpush2.bf16.msra.mxu0 0
        %2208 = vmatprep.subr.bf16.mxu0 0
        %2209 = vmatpush2.bf16.msra.mxu0 0
        %2210 = vmatprep.mubr.bf16.mxu0 0
        %2211 = vmatmul.mubr.bf16.gmra.mxu0 %v1942
        %v2212 = vpop.f32.mrf.mxu0
        %v2213 = vadd.f32 0.0, %v2212
        %v2214 = vpop.f32.mrf.mxu0
        %v2215 = vadd.f32 0.0, %v2214
        %v2216 = vpop.f32.mrf.mxu0
        %v2217 = vadd.f32 0.0, %v2216
        %v2218 = vpop.f32.mrf.mxu0
        %v2219 = vadd.f32 0.0, %v2218
        %2220 = vdwg.mxu0
        %v2221 = vxor.u32 %v2170, 2147483648
        %v2222 = vxor.u32 %v2172, 2147483648
        %v2223 = vxor.u32 %v2174, 2147483648
        %v2224 = vxor.u32 %v2176, 2147483648
        %v2225 = vmul.f32 %v2221, 1.442695
        %v2226 = vpow.pop %v2225
        %v2227 = vmul.f32 %v2222, 1.442695
        %v2228 = vpow.pop %v2227
        %v2229 = vmul.f32 %v2223, 1.442695
        %v2230 = vpow.pop %v2229
        %v2231 = vmul.f32 %v2224, 1.442695
        %v2232 = vpow.pop %v2231
        %v2233 = vadd.f32 %v2226, 1.0
        %v2234 = vadd.f32 %v2228, 1.0
        %v2235 = vadd.f32 %v2230, 1.0
        %v2236 = vadd.f32 %v2232, 1.0
        %v2237 = vrcp.pop %v2233
        %v2238 = vmul.f32 1.0, %v2237
        %v2239 = vrcp.pop %v2234
        %v2240 = vmul.f32 1.0, %v2239
        %v2241 = vrcp.pop %v2235
        %v2242 = vmul.f32 1.0, %v2241
        %v2243 = vrcp.pop %v2236
        %v2244 = vmul.f32 1.0, %v2243
        %v2245 = vmul.f32 %v2170, %v2238
        %v2246 = vmul.f32 %v2172, %v2240
        %v2247 = vmul.f32 %v2174, %v2242
        %v2248 = vmul.f32 %v2176, %v2244
        %v2249 = vmul.f32 %v2245, %v2213
        %v2250 = vmul.f32 %v2246, %v2215
        %v2251 = vmul.f32 %v2247, %v2217
        %v2252 = vmul.f32 %v2248, %v2219
        %v2253 = vpack.c.bf16 %v2251, %v2249
        %v2254 = vpack.c.bf16 %v2252, %v2250
        %v2255 = vld [vmem:[#allocation17] sm:$0xf]
        %v2256 = vld [vmem:[#allocation17 + $0x4] sm:$0xf]
        %v2257 = vld [vmem:[#allocation17 + $0x8] sm:$0xf]
        %v2258 = vld [vmem:[#allocation17 + $0xc] sm:$0xf]
        %v2259 = vld [vmem:[#allocation17 + $0x10] sm:$0xf]
        %v2260 = vld [vmem:[#allocation17 + $0x14] sm:$0xf]
        %v2261 = vld [vmem:[#allocation17 + $0x18] sm:$0xf]
        %v2262 = vld [vmem:[#allocation17 + $0x1c] sm:$0xf]
        %v2263 = vld [vmem:[#allocation17 + $0x20] sm:$0xf]
        %v2264 = vld [vmem:[#allocation17 + $0x24] sm:$0xf]
        %v2265 = vld [vmem:[#allocation17 + $0x28] sm:$0xf]
        %v2266 = vld [vmem:[#allocation17 + $0x2c] sm:$0xf]
        %v2267 = vld [vmem:[#allocation17 + $0x30] sm:$0xf]
        %v2268 = vld [vmem:[#allocation17 + $0x34] sm:$0xf]
        %v2269 = vld [vmem:[#allocation17 + $0x38] sm:$0xf]
        %v2270 = vld [vmem:[#allocation17 + $0x3c] sm:$0xf]
        %v2271 = vld [vmem:[#allocation17 + $0x40] sm:$0xf]
        %v2272 = vld [vmem:[#allocation17 + $0x44] sm:$0xf]
        %v2273 = vld [vmem:[#allocation17 + $0x48] sm:$0xf]
        %v2274 = vld [vmem:[#allocation17 + $0x4c] sm:$0xf]
        %v2275 = vld [vmem:[#allocation17 + $0x50] sm:$0xf]
        %v2276 = vld [vmem:[#allocation17 + $0x54] sm:$0xf]
        %v2277 = vld [vmem:[#allocation17 + $0x58] sm:$0xf]
        %v2278 = vld [vmem:[#allocation17 + $0x5c] sm:$0xf]
        %v2279 = vld [vmem:[#allocation17 + $0x60] sm:$0xf]
        %v2280 = vld [vmem:[#allocation17 + $0x64] sm:$0xf]
        %v2281 = vld [vmem:[#allocation17 + $0x68] sm:$0xf]
        %v2282 = vld [vmem:[#allocation17 + $0x6c] sm:$0xf]
        %v2283 = vld [vmem:[#allocation17 + $0x70] sm:$0xf]
        %v2284 = vld [vmem:[#allocation17 + $0x74] sm:$0xf]
        %v2285 = vld [vmem:[#allocation17 + $0x78] sm:$0xf]
        %v2286 = vld [vmem:[#allocation17 + $0x7c] sm:$0xf]
        %v2319 = vunpack.c.l.b16 %v2255
        %v2320 = vunpack.c.l.b16 %v2256
        %v2321 = vunpack.c.l.b16 %v2257
        %v2322 = vunpack.c.l.b16 %v2258
        %v2323 = vunpack.c.l.b16 %v2259
        %v2324 = vunpack.c.l.b16 %v2260
        %v2325 = vunpack.c.l.b16 %v2261
        %v2326 = vunpack.c.l.b16 %v2262
        %v2327 = vunpack.c.l.b16 %v2263
        %v2328 = vunpack.c.l.b16 %v2264
        %v2329 = vunpack.c.l.b16 %v2265
        %v2330 = vunpack.c.l.b16 %v2266
        %v2331 = vunpack.c.l.b16 %v2267
        %v2332 = vunpack.c.l.b16 %v2268
        %v2333 = vunpack.c.l.b16 %v2269
        %v2334 = vunpack.c.l.b16 %v2270
        %v2335 = vunpack.c.l.b16 %v2271
        %v2336 = vunpack.c.l.b16 %v2272
        %v2337 = vunpack.c.l.b16 %v2273
        %v2338 = vunpack.c.l.b16 %v2274
        %v2339 = vunpack.c.l.b16 %v2275
        %v2340 = vunpack.c.l.b16 %v2276
        %v2341 = vunpack.c.l.b16 %v2277
        %v2342 = vunpack.c.l.b16 %v2278
        %v2343 = vunpack.c.l.b16 %v2279
        %v2344 = vunpack.c.l.b16 %v2280
        %v2345 = vunpack.c.l.b16 %v2281
        %v2346 = vunpack.c.l.b16 %v2282
        %v2347 = vunpack.c.l.b16 %v2283
        %v2348 = vunpack.c.l.b16 %v2284
        %v2349 = vunpack.c.l.b16 %v2285
        %v2350 = vunpack.c.l.b16 %v2286
        %v2351 = vpack.c.b16 %v2320, %v2319
        %v2352 = vpack.c.b16 %v2322, %v2321
        %v2353 = vpack.c.b16 %v2324, %v2323
        %v2354 = vpack.c.b16 %v2326, %v2325
        %v2355 = vpack.c.b16 %v2328, %v2327
        %v2356 = vpack.c.b16 %v2330, %v2329
        %v2357 = vpack.c.b16 %v2332, %v2331
        %v2358 = vpack.c.b16 %v2334, %v2333
        %v2359 = vpack.c.b16 %v2336, %v2335
        %v2360 = vpack.c.b16 %v2338, %v2337
        %v2361 = vpack.c.b16 %v2340, %v2339
        %v2362 = vpack.c.b16 %v2342, %v2341
        %v2363 = vpack.c.b16 %v2344, %v2343
        %v2364 = vpack.c.b16 %v2346, %v2345
        %v2365 = vpack.c.b16 %v2348, %v2347
        %v2366 = vpack.c.b16 %v2350, %v2349
        %2383 = vmatprep.subr.bf16.mxu0 0
        %2384 = vmatpush1.bf16.msra.mxu0 %v2358
        %2385 = vmatprep.subr.bf16.mxu0 0
        %2386 = vmatpush1.bf16.msra.mxu0 %v2357
        %2387 = vmatprep.subr.bf16.mxu0 0
        %2388 = vmatpush1.bf16.msra.mxu0 %v2356
        %2389 = vmatprep.subr.bf16.mxu0 0
        %2390 = vmatpush1.bf16.msra.mxu0 %v2355
        %2391 = vmatprep.subr.bf16.mxu0 0
        %2392 = vmatpush1.bf16.msra.mxu0 %v2354
        %2393 = vmatprep.subr.bf16.mxu0 0
        %2394 = vmatpush1.bf16.msra.mxu0 %v2353
        %2395 = vmatprep.subr.bf16.mxu0 0
        %2396 = vmatpush1.bf16.msra.mxu0 %v2352
        %2397 = vmatprep.subr.bf16.mxu0 0
        %2398 = vmatpush1.bf16.msra.mxu0 %v2351
        %2399 = vmatprep.subr.bf16.mxu0 0
        %2400 = vmatpush2.bf16.msra.mxu0 %v2366
        %2401 = vmatprep.subr.bf16.mxu0 0
        %2402 = vmatpush2.bf16.msra.mxu0 %v2365
        %2403 = vmatprep.subr.bf16.mxu0 0
        %2404 = vmatpush2.bf16.msra.mxu0 %v2364
        %2405 = vmatprep.subr.bf16.mxu0 0
        %2406 = vmatpush2.bf16.msra.mxu0 %v2363
        %2407 = vmatprep.subr.bf16.mxu0 0
        %2408 = vmatpush2.bf16.msra.mxu0 %v2362
        %2409 = vmatprep.subr.bf16.mxu0 0
        %2410 = vmatpush2.bf16.msra.mxu0 %v2361
        %2411 = vmatprep.subr.bf16.mxu0 0
        %2412 = vmatpush2.bf16.msra.mxu0 %v2360
        %2413 = vmatprep.subr.bf16.mxu0 0
        %2414 = vmatpush2.bf16.msra.mxu0 %v2359
        %2415 = vmatprep.mubr.bf16.mxu0 %v2254
        %2416 = vmatmul.mubr.bf16.gmra.mxu0 %v2253
        %v2417 = vpop.f32.mrf.mxu0
        %v2418 = vadd.f32 0.0, %v2417
        %v2419 = vpop.f32.mrf.mxu0
        %v2420 = vpop.f32.mrf.mxu0
        %v2421 = vadd.f32 0.0, %v2420
        %v2422 = vpop.f32.mrf.mxu0
        %2423 = vdwg.mxu0
        %v2424 = vadd.f32 %v1900, %v2418
        %v2425 = vadd.f32 %v1901, %v2421
        %2426 = vst [vmem:[%s545] sm:$0xff] %v2424
        %2427 = vst [vmem:[%s545 + $0x8] sm:$0xff] %v2425
        %s2428 = sand.u32 %s319, 1
        %s2429 = scalar_lea.sflag [#allocation8], %s2428
        %s2430 = sand.u32 %s319, 1
        %s2431 = smul.addr %s2430, 16
        %s2432 = scalar_lea.vmem [#allocation18], %s2431
        // Predicated region
        $region101: #{tpu_custom_call.1} parent=71 // pred_check
          %p2433 = pneg %p329
        $region102: #{tpu_custom_call.1} parent=71 // pred_check_branch
          %2435 = sbr.rel (%p2433) target = $region104
        $region103: #{tpu_custom_call.1} parent=71 // pred_region
          %s2437 = ssub.s32 256, 256
          %2438 = vsyncadd %s2429, %s2437
          %s2439 = smul.addr %s33, 2
          %s2440 = smul.addr %s2439, 128
          %s2441 = scalar_lea.hbm %s13, %s2440
          %s2442 = sshll.u32 %s2432, 4
          %s2443 = int_to_ptr.vmem [resolvable:$true] %s2442
          %2448 = dma.vmem_to_hbm [thread:$0]  %s2443, 256, %s2441, %s2429, 128, 128, 8
        $region104: #{tpu_custom_call.1} parent=71 // pred_fallthru
          _
      $region72: #{tpu_custom_call.1} parent=5 // pred_fallthru
        _
      %p2449 = scmp.le.s32.totalorder 2, %s28
      // Predicated region
      $region105: #{tpu_custom_call.1} parent=5 // pred_check
        %p2450 = pneg %p2449
      $region106: #{tpu_custom_call.1} parent=5 // pred_check_branch
        %2452 = sbr.rel (%p2450) target = $region108
      $region107: #{tpu_custom_call.1} parent=5 // pred_region
        %s2453 = ssub.s32 %s28, 2
        // Predicated region
        $region109: #{tpu_custom_call.1} parent=107 // pred_check
          %p2454 = pneg %p335
        $region110: #{tpu_custom_call.1} parent=107 // pred_check_branch
          %2456 = sbr.rel (%p2454) target = $region112
        $region111: #{tpu_custom_call.1} parent=107 // pred_region
          %s2457 = sand.u32 %s320, 1
          %s2458 = scalar_lea.sflag [#allocation8], %s2457
          %s2459 = sand.u32 %s320, 1
          %s2460 = smul.addr %s2459, 16
          %s2461 = scalar_lea.vmem [#allocation18], %s2460
          %2462 = dma.done %s2458, 256
        $region112: #{tpu_custom_call.1} parent=107 // pred_fallthru
          _
      $region108: #{tpu_custom_call.1} parent=5 // pred_fallthru
        _
    $region6: #{tpu_custom_call.1} parent=1 // loop_footer
      %s32 = sadd.s32 1, %s28
    $region7: #{tpu_custom_call.1} parent=1 // loop_footer_branch
      %27 = sbr.rel target = $region3
    $region8: #{tpu_custom_call.1} parent=1 // loop_exit
      _
    %2463 = vsyncpa [#allocation7], 1
    %s2464 = scalar_lea.sflag [#allocation7], 1
    %2465 = vsyncpa %s2464, 1
    %2466 = vsyncpa [#allocation10], 1
    %2467 = vsyncpa [#allocation13], 1
    %2468 = vsyncpa [#allocation16], 1
    %2469 = vsyncpa [#allocation8], 1
    %s2470 = scalar_lea.sflag [#allocation8], 1
    %2471 = vsyncpa %s2470, 1

</llo_original>
